<compile_context>
chip_gen: v7x
topology: tpu7x:2x2x1
jax: 0.10.0
libtpu: 0.0.40
codegen_flags: <defaults>
</compile_context>

<pallas_src>
import functools

import jax
import jax.numpy as jnp
from jax.experimental import pallas as pl
from jax.experimental.pallas import tpu as pltpu


def _pixel_unshuffle_kernel(x_ref, d_ref, o_ref, *, sf, precision):
    # x_ref : (1, Cb, Tb, H2, sf*W)         input tile (native dtype); lane = hr*W + w2*sf + wr
    # d_ref : (W, W)                        one-hot deinterleave: lane w2*sf+wr -> wr*W2+w2
    # o_ref : (1, sf, sf, Cb, Tb, H2, W2)   un-flattened output tile
    _, Cb, Tb, H2, sfW = x_ref.shape
    W = sfW // sf
    W2 = W // sf

    x = x_ref[0]
    # Merging the major dims into the sublane dim is relayout-free when H2 % 8 == 0
    # (16 for bf16); otherwise Mosaic inserts one tile copy here.
    xm = x.reshape(Cb * Tb * H2, sfW)

    for hr in range(sf):
        # One fused lane permutation per hr slice on the MXU (exact one-hot selection).
        # TODO(synk): replace with a direct strided lane slice / gather once Mosaic supports
        #             it; the matmul path is not NaN/Inf-safe (0*Inf) unlike a pure gather.
        ym = jnp.dot(xm[:, hr * W:(hr + 1) * W], d_ref[...],
                     preferred_element_type=jnp.float32,
                     precision=precision)
        y = ym.reshape(Cb, Tb, H2, W).astype(o_ref.dtype)
        for wr in range(sf):
            # sf^2 wide slab stores; no per-h2 masked partial stores, no scratch round trip.
            o_ref[0, hr, wr, :, :, :, :] = y[:, :, :, wr * W2:(wr + 1) * W2]


def _deinterleave_matrix(sf, W, dtype):
    """(W, W) one-hot P with P[w2*sf + wr, wr*W2 + w2] = 1 (identical for every hr block)."""
    W2 = W // sf
    w = jnp.arange(W)
    g = (w % sf) * W2 + (w // sf)
    return (g[:, None] == jnp.arange(W)[None, :]).astype(dtype)


def _vmem_budget():
    """Returns (input-tile byte budget, vmem_limit_bytes), generation aware."""
    try:
        cap = pltpu.get_tpu_info().vmem_capacity_bytes
    except Exception:
        cap = None
    if cap is not None and cap >= 96 * 1024 * 1024:        # v5e / v6e: 128 MiB VMEM
        return 6 * 1024 * 1024, 64 * 1024 * 1024
    return 3 * 1024 * 1024, 48 * 1024 * 1024               # v7x (64 MiB VMEM) or unknown


def _pick_blocks(B, C, T, bytes_per_ct, budget):
    """Pick (Cb, Tb) divisors of (C, T) keeping the per-step input tile under `budget`."""
    Tb = max((d for d in range(1, T + 1) if T % d == 0 and d * bytes_per_ct <= budget),
             default=1)
    Cb = max((d for d in range(1, C + 1) if C % d == 0 and Tb * d * bytes_per_ct <= budget),
             default=1)
    # Keep >= 2 grid points so both v7x TensorCores get work (harmless on v5e/v6e).
    if B * (C // Cb) * (T // Tb) < 2:
        tb2 = max((d for d in range(1, Tb) if T % d == 0), default=None)
        cb2 = max((d for d in range(1, Cb) if C % d == 0), default=None)
        if tb2 is not None:
            Tb = tb2
        elif cb2 is not None:
            Cb = cb2
        # TODO(synk): if B == C == T == 1 the grid stays a single point; would need to split
        #             H2 across the grid to feed the second v7x core.
    return Cb, Tb


def pixel_shuffle_forward(x, scaling_factor):
    """Pallas implementation of PixelShuffleLayer(scaling_factor).forward(x)."""
    B, C, T, H, W = x.shape
    sf = int(scaling_factor)
    assert H % sf == 0 and W % sf == 0, "spatial dims must be divisible by scaling_factor"
    H2, W2 = H // sf, W // sf

    dt = jnp.dtype(x.dtype)
    if not jnp.issubdtype(dt, jnp.floating):
        # TODO(synk): integer dtypes need a non-MXU permutation path (f32 accumulate is
        #             lossy beyond 2^24); the PyTorch op is dtype-agnostic.
        raise NotImplementedError("pixel_shuffle_forward supports floating dtypes only")
    # HIGHEST only where needed for exactness (f32+); bf16/fp8 one-hot matmuls with f32
    # accumulation are already exact at DEFAULT precision (saves 3-6x MXU passes).
    precision = (jax.lax.Precision.HIGHEST if dt.itemsize >= 4
                 else jax.lax.Precision.DEFAULT)

    budget, vmem_limit = _vmem_budget()
    bytes_per_ct = H * W * dt.itemsize
    Cb, Tb = _pick_blocks(B, C, T, bytes_per_ct, budget)
    tile_bytes = Cb * Tb * bytes_per_ct
    # in + out double-buffered (output tile == input tile size) plus headroom.
    vmem_limit = max(vmem_limit, 4 * tile_bytes + (2 << 20))

    grid = (B, C // Cb, T // Tb)

    # Free, contiguous view: hr becomes a contiguous lane range on the last dim.
    x_view = x.reshape(B, C, T, H2, sf * W)
    d = _deinterleave_matrix(sf, W, x.dtype)

    out = pl.pallas_call(
        functools.partial(_pixel_unshuffle_kernel, sf=sf, precision=precision),
        out_shape=jax.ShapeDtypeStruct((B, sf, sf, C, T, H2, W2), x.dtype),
        grid=grid,
        in_specs=[
            pl.BlockSpec((1, Cb, Tb, H2, sf * W), lambda b, ci, ti: (b, ci, ti, 0, 0)),
            pl.BlockSpec((W, W), lambda b, ci, ti: (0, 0)),
        ],
        out_specs=pl.BlockSpec((1, sf, sf, Cb, Tb, H2, W2),
                               lambda b, ci, ti: (b, 0, 0, ci, ti, 0, 0)),
        compiler_params=pltpu.CompilerParams(
            dimension_semantics=("parallel", "parallel", "parallel"),
            vmem_limit_bytes=int(vmem_limit),
        ),
    )(x_view, d)

    # Free metadata reshape: (B, hr, wr, C, T, H2, W2) -> (B, C*sf^2, T, H2, W2)
    # with d = hr*sf*C + wr*C + c, exactly the PyTorch channel ordering.
    return out.reshape(B, C * sf * sf, T, H2, W2)


def _reference(x, sf):
    # pure-JAX reference replicating the PyTorch permute/split/view/stack chain
    B, C, T, H, W = x.shape
    y = x.reshape(B, C, T, H // sf, sf, W // sf, sf)
    y = jnp.transpose(y, (0, 4, 6, 1, 2, 3, 5))        # (B, hr, wr, C, T, H2, W2)
    return y.reshape(B, C * sf * sf, T, H // sf, W // sf)


if __name__ == "__main__":
    sf = 2
    key = jax.random.PRNGKey(0)
    x = jax.random.normal(key, (2, 4, 3, 16, 16), dtype=jnp.float32)  # (B, C, T, H, W)

    out = jax.block_until_ready(pixel_shuffle_forward(x, sf))
    ref = _reference(x, sf)
    assert out.shape == (2, 16, 3, 8, 8), out.shape
    assert bool(jnp.allclose(out, ref, rtol=1e-6, atol=1e-6)), "mismatch vs reference"
    print("KERNEL_OK")
</pallas_src>

<mosaic_0001>
module attributes {stable_mosaic.version = 11 : i64} {
  func.func @_pixel_unshuffle_kernel(%arg0: i32, %arg1: i32, %arg2: i32, %arg3: memref<1x4x3x8x32xf32, #tpu.memory_space<vmem>>, %arg4: memref<16x16xf32, #tpu.memory_space<vmem>>, %arg5: memref<1x2x2x4x3x8x8xf32, #tpu.memory_space<vmem>>) attributes {dimension_semantics = [#tpu.dimension_semantics<parallel>, #tpu.dimension_semantics<parallel>, #tpu.dimension_semantics<parallel>], iteration_bounds = array<i64: 2, 1, 1>, scalar_prefetch = 0 : i64, scratch_operands = 0 : i64, tpu.core_type = #tpu.core_type<tc>, window_params = [{transform_indices = @transform_0, window_bounds = array<i64: 1, 4, 3, 8, 32>}, {pipeline_mode = #tpu.pipeline_mode<synchronous>, transform_indices = @transform_1, window_bounds = array<i64: 16, 16>}, {transform_indices = @transform_2, window_bounds = array<i64: 1, 2, 2, 4, 3, 8, 8>}]} {
    %c0 = arith.constant 0 : index
    %c0_0 = arith.constant 0 : index
    %c0_1 = arith.constant 0 : index
    %c0_2 = arith.constant 0 : index
    %c0_3 = arith.constant 0 : index
    %0 = vector.load %arg3[%c0, %c0_0, %c0_1, %c0_2, %c0_3] : memref<1x4x3x8x32xf32, #tpu.memory_space<vmem>>, vector<1x4x3x8x32xf32>
    %1 = vector.shape_cast %0 : vector<1x4x3x8x32xf32> to vector<4x3x8x32xf32>
    %2 = vector.shape_cast %1 : vector<4x3x8x32xf32> to vector<96x32xf32>
    %3 = vector.extract_strided_slice %2 {offsets = [0, 0], sizes = [96, 16], strides = [1, 1]} : vector<96x32xf32> to vector<96x16xf32>
    %c0_4 = arith.constant 0 : index
    %c0_5 = arith.constant 0 : index
    %4 = vector.load %arg4[%c0_4, %c0_5] : memref<16x16xf32, #tpu.memory_space<vmem>>, vector<16x16xf32>
    %cst = arith.constant dense<0.000000e+00> : vector<96x16xf32>
    %5 = tpu.matmul %3, %4, %cst {dimension_numbers = #tpu.dot_dimension_numbers<[1], [0], [0], [1], [0, 0, 1, 1], [], []>, precision = #tpu.contract_precision<fp32>} : vector<96x16xf32>, vector<16x16xf32>, vector<96x16xf32> -> vector<96x16xf32>
    %6 = vector.shape_cast %5 : vector<96x16xf32> to vector<4x3x8x16xf32>
    %7 = vector.extract_strided_slice %6 {offsets = [0, 0, 0, 0], sizes = [4, 3, 8, 8], strides = [1, 1, 1, 1]} : vector<4x3x8x16xf32> to vector<4x3x8x8xf32>
    %c0_6 = arith.constant 0 : index
    %c0_7 = arith.constant 0 : index
    %c0_8 = arith.constant 0 : index
    %c0_9 = arith.constant 0 : index
    %c0_10 = arith.constant 0 : index
    %c0_11 = arith.constant 0 : index
    %c0_12 = arith.constant 0 : index
    %8 = vector.load %arg5[%c0_6, %c0_7, %c0_8, %c0_9, %c0_10, %c0_11, %c0_12] : memref<1x2x2x4x3x8x8xf32, #tpu.memory_space<vmem>>, vector<1x1x1x4x3x8x8xf32>
    %9 = vector.shape_cast %8 : vector<1x1x1x4x3x8x8xf32> to vector<4x3x8x8xf32>
    %10 = vector.shape_cast %7 : vector<4x3x8x8xf32> to vector<1x1x1x4x3x8x8xf32>
    tpu.vector_store %arg5[%c0_6, %c0_7, %c0_8, %c0_9, %c0_10, %c0_11, %c0_12], %10 {strides = array<i32>} : memref<1x2x2x4x3x8x8xf32, #tpu.memory_space<vmem>>, vector<1x1x1x4x3x8x8xf32>,
    %11 = vector.extract_strided_slice %6 {offsets = [0, 0, 0, 8], sizes = [4, 3, 8, 8], strides = [1, 1, 1, 1]} : vector<4x3x8x16xf32> to vector<4x3x8x8xf32>
    %c0_13 = arith.constant 0 : index
    %c0_14 = arith.constant 0 : index
    %c1 = arith.constant 1 : index
    %c0_15 = arith.constant 0 : index
    %c0_16 = arith.constant 0 : index
    %c0_17 = arith.constant 0 : index
    %c0_18 = arith.constant 0 : index
    %12 = vector.load %arg5[%c0_13, %c0_14, %c1, %c0_15, %c0_16, %c0_17, %c0_18] : memref<1x2x2x4x3x8x8xf32, #tpu.memory_space<vmem>>, vector<1x1x1x4x3x8x8xf32>
    %13 = vector.shape_cast %12 : vector<1x1x1x4x3x8x8xf32> to vector<4x3x8x8xf32>
    %14 = vector.shape_cast %11 : vector<4x3x8x8xf32> to vector<1x1x1x4x3x8x8xf32>
    tpu.vector_store %arg5[%c0_13, %c0_14, %c1, %c0_15, %c0_16, %c0_17, %c0_18], %14 {strides = array<i32>} : memref<1x2x2x4x3x8x8xf32, #tpu.memory_space<vmem>>, vector<1x1x1x4x3x8x8xf32>,
    %15 = vector.extract_strided_slice %2 {offsets = [0, 16], sizes = [96, 16], strides = [1, 1]} : vector<96x32xf32> to vector<96x16xf32>
    %c0_19 = arith.constant 0 : index
    %c0_20 = arith.constant 0 : index
    %16 = vector.load %arg4[%c0_19, %c0_20] : memref<16x16xf32, #tpu.memory_space<vmem>>, vector<16x16xf32>
    %cst_21 = arith.constant dense<0.000000e+00> : vector<96x16xf32>
    %17 = tpu.matmul %15, %16, %cst_21 {dimension_numbers = #tpu.dot_dimension_numbers<[1], [0], [0], [1], [0, 0, 1, 1], [], []>, precision = #tpu.contract_precision<fp32>} : vector<96x16xf32>, vector<16x16xf32>, vector<96x16xf32> -> vector<96x16xf32>
    %18 = vector.shape_cast %17 : vector<96x16xf32> to vector<4x3x8x16xf32>
    %19 = vector.extract_strided_slice %18 {offsets = [0, 0, 0, 0], sizes = [4, 3, 8, 8], strides = [1, 1, 1, 1]} : vector<4x3x8x16xf32> to vector<4x3x8x8xf32>
    %c0_22 = arith.constant 0 : index
    %c1_23 = arith.constant 1 : index
    %c0_24 = arith.constant 0 : index
    %c0_25 = arith.constant 0 : index
    %c0_26 = arith.constant 0 : index
    %c0_27 = arith.constant 0 : index
    %c0_28 = arith.constant 0 : index
    %20 = vector.load %arg5[%c0_22, %c1_23, %c0_24, %c0_25, %c0_26, %c0_27, %c0_28] : memref<1x2x2x4x3x8x8xf32, #tpu.memory_space<vmem>>, vector<1x1x1x4x3x8x8xf32>
    %21 = vector.shape_cast %20 : vector<1x1x1x4x3x8x8xf32> to vector<4x3x8x8xf32>
    %22 = vector.shape_cast %19 : vector<4x3x8x8xf32> to vector<1x1x1x4x3x8x8xf32>
    tpu.vector_store %arg5[%c0_22, %c1_23, %c0_24, %c0_25, %c0_26, %c0_27, %c0_28], %22 {strides = array<i32>} : memref<1x2x2x4x3x8x8xf32, #tpu.memory_space<vmem>>, vector<1x1x1x4x3x8x8xf32>,
    %23 = vector.extract_strided_slice %18 {offsets = [0, 0, 0, 8], sizes = [4, 3, 8, 8], strides = [1, 1, 1, 1]} : vector<4x3x8x16xf32> to vector<4x3x8x8xf32>
    %c0_29 = arith.constant 0 : index
    %c1_30 = arith.constant 1 : index
    %c1_31 = arith.constant 1 : index
    %c0_32 = arith.constant 0 : index
    %c0_33 = arith.constant 0 : index
    %c0_34 = arith.constant 0 : index
    %c0_35 = arith.constant 0 : index
    %24 = vector.load %arg5[%c0_29, %c1_30, %c1_31, %c0_32, %c0_33, %c0_34, %c0_35] : memref<1x2x2x4x3x8x8xf32, #tpu.memory_space<vmem>>, vector<1x1x1x4x3x8x8xf32>
    %25 = vector.shape_cast %24 : vector<1x1x1x4x3x8x8xf32> to vector<4x3x8x8xf32>
    %26 = vector.shape_cast %23 : vector<4x3x8x8xf32> to vector<1x1x1x4x3x8x8xf32>
    tpu.vector_store %arg5[%c0_29, %c1_30, %c1_31, %c0_32, %c0_33, %c0_34, %c0_35], %26 {strides = array<i32>} : memref<1x2x2x4x3x8x8xf32, #tpu.memory_space<vmem>>, vector<1x1x1x4x3x8x8xf32>,
    return
  }
  func.func @transform_0(%arg0: i32, %arg1: i32, %arg2: i32) -> (i32, i32, i32, i32, i32) {
    %c0_i32 = arith.constant 0 : i32
    %c0_i32_0 = arith.constant 0 : i32
    %c0_i32_1 = arith.constant 0 : i32
    return %arg0, %arg1, %arg2, %c0_i32, %c0_i32_0 : i32, i32, i32, i32, i32
  }
  func.func @transform_1(%arg0: i32, %arg1: i32, %arg2: i32) -> (i32, i32) {
    %c0_i32 = arith.constant 0 : i32
    %c0_i32_0 = arith.constant 0 : i32
    %c0_i32_1 = arith.constant 0 : i32
    return %c0_i32, %c0_i32_0 : i32, i32
  }
  func.func @transform_2(%arg0: i32, %arg1: i32, %arg2: i32) -> (i32, i32, i32, i32, i32, i32, i32) {
    %c0_i32 = arith.constant 0 : i32
    %c0_i32_0 = arith.constant 0 : i32
    %c0_i32_1 = arith.constant 0 : i32
    %c0_i32_2 = arith.constant 0 : i32
    %c0_i32_3 = arith.constant 0 : i32
    return %arg0, %c0_i32, %c0_i32_0, %arg1, %arg2, %c0_i32_1, %c0_i32_2 : i32, i32, i32, i32, i32, i32, i32
  }
}

</mosaic_0001>

<llo_original>
// kernel: tpu_custom_call.1
$region0: #{tpu_custom_call.1}
  #allocation0 [shape = 'u32[]', space=smem, size = 0x4, offset = 0x4, fixed_abs, tag = 'smem constant byte address 0x4 - core index']
  #allocation1 [shape = 'u32[144,128]{1,0:T(1,128)}', space=vmem, size = 0x12000, scoped, tag = 'internal scratch']
  %s0 = inlined_call_operand.hbm [shape: f32[2,4,3,8,32], index: 0, kind: input, shape index: {}]
  %s1 = inlined_call_operand.hbm [shape: f32[16,16], index: 1, kind: input, shape index: {}]
  %s2 = inlined_call_operand.hbm [shape: f32[2,2,2,4,3,8,8], index: 2, kind: output, shape index: {}]
  %s3 = sld [smem:[#allocation0]]
  $region49: #{tpu_custom_call.1} parent=0
    _
  %s5 = ssub.s32 1, %s3
  %s6 = scalar_select 0, %s5, %s3
  $region1: #{tpu_custom_call.1} parent=0
    #allocation2 [shape = 'u8[98304]{0}', space=vmem, size = 0x18000, scoped, tag = 'input window, operand 0']
    #allocation3 [shape = 's32[2]{0}', space=sflag, size = 0x8, scoped, tag = 'scoped memory for tpu_custom_call.1']
    #allocation4 [shape = 's32[2]{0}', space=sflag, size = 0x8, scoped, tag = 'scoped memory for tpu_custom_call.1']
    #allocation5 [shape = 'u8[8192]{0}', space=vmem, size = 0x2000, scoped, tag = 'input window, operand 1, single buffered']
    #allocation6 [shape = 's32[1]{0}', space=sflag, size = 0x4, scoped, tag = 'scoped memory for tpu_custom_call.1']
    #allocation7 [shape = 'u8[393216]{0}', space=vmem, size = 0x60000, scoped, tag = 'output window, operand 0']
    %7 = vsyncpa [#allocation3], 0
    %s8 = scalar_lea.sflag [#allocation3], 1
    %9 = vsyncpa %s8, 0
    %10 = vsyncpa [#allocation6], 0
    %11 = vsyncpa [#allocation4], 0
    %s12 = scalar_lea.sflag [#allocation4], 1
    %13 = vsyncpa %s12, 0
    loop: start=0, step=1, limit=4
    $region2: #{tpu_custom_call.1} parent=1 // loop_pre_header
      _
    $region3: #{tpu_custom_call.1} parent=1 // loop_header
      %s15 = sphi 0, %s19
      %p16 = scmp.ge.s32.totalorder %s15, 4
      %s22 = sphi 0, %s41
      %s23 = sphi 0, %s37
      %s24 = sphi 0, %s33
      %s25 = sphi 0, %s22
      %s26 = sphi 0, %s23
      %s27 = sphi 0, %s24
      %s28 = sphi 0, %s25
      %s29 = sphi 0, %s26
      %s30 = sphi 0, %s27
      %s48 = sphi 0, %s50
      %s51 = sphi 0, %s48
      %s52 = sphi 0, %s51
      %s68 = sphi 0, %s52
      %s72 = sphi 0, %s72
      %s74 = sphi 0, %s72
      %s75 = sphi 0, %s74
      %s89 = sphi 0, %s75
      %s99 = sphi 0, %s101
      %s102 = sphi 0, %s99
      %s103 = sphi 0, %s102
      %s119 = sphi 0, %s103
    $region4: #{tpu_custom_call.1} parent=1 // loop_header_branch
      %18 = sbr.rel (%p16) target = $region8
    $region5: #{tpu_custom_call.1} parent=1 // loop_body
      %s20 = ssub.s32 %s15, 1
      %s21 = ssub.s32 %s15, 2
      %s31 = sadd.s32 1, %s24
      %p32 = scmp.ge.s32.totalorder %s31, 1
      %s33 = scalar_select %p32, 0, %s31
      %s34 = sadd.s32 1, %s23
      %s35 = scalar_select %p32, %s34, %s23
      %p36 = scmp.ge.s32.totalorder %s35, 1
      %s37 = scalar_select %p36, 0, %s35
      %s38 = sadd.s32 1, %s22
      %s39 = scalar_select %p36, %s38, %s22
      %p40 = scmp.ge.s32.totalorder %s39, 2
      %s41 = scalar_select %p40, 0, %s39
      %s42 = ssub.s32 %s22, %s41
      %s43 = ssub.s32 %s23, %s37
      %s44 = sor.u32 %s42, %s43
      %s45 = ssub.s32 %s24, %s33
      %s46 = sor.u32 %s44, %s45
      %p47 = scmp.eq.s32.totalorder %s46, 0
      %s49 = sadd.s32 %s48, 1
      %s50 = scalar_select %p47, %s48, %s49
      %p53 = pneg %p47
      %p54 = scmp.eq.s32.totalorder %s15, 1
      %p55 = por %p53, %p54
      %p56 = scmp.ne.s32.totalorder %s48, %s51
      %p57 = scmp.eq.s32.totalorder %s15, 0
      %p58 = por %p56, %p57
      %p59 = scmp.ne.s32.totalorder %s48, %s51
      %p60 = scmp.eq.s32.totalorder %s20, 1
      %p61 = por %p59, %p60
      %p62 = scmp.ne.s32.totalorder %s51, %s52
      %p63 = scmp.eq.s32.totalorder %s20, 0
      %p64 = por %p62, %p63
      %p65 = scmp.ne.s32.totalorder %s51, %s52
      %p66 = scmp.eq.s32.totalorder %s21, 1
      %p67 = por %p65, %p66
      %p69 = scmp.ne.s32.totalorder %s52, %s68
      %p70 = scmp.eq.s32.totalorder %s21, 0
      %p71 = por %p69, %p70
      %s73 = sadd.s32 %s72, 1
      %p76 = scmp.eq.s32.totalorder %s15, 1
      %p77 = scmp.ne.s32.totalorder %s72, %s74
      %p78 = scmp.eq.s32.totalorder %s15, 0
      %p79 = por %p77, %p78
      %p80 = scmp.ne.s32.totalorder %s72, %s74
      %p81 = scmp.eq.s32.totalorder %s20, 1
      %p82 = por %p80, %p81
      %p83 = scmp.ne.s32.totalorder %s74, %s75
      %p84 = scmp.eq.s32.totalorder %s20, 0
      %p85 = por %p83, %p84
      %p86 = scmp.ne.s32.totalorder %s74, %s75
      %p87 = scmp.eq.s32.totalorder %s21, 1
      %p88 = por %p86, %p87
      %p90 = scmp.ne.s32.totalorder %s75, %s89
      %p91 = scmp.eq.s32.totalorder %s21, 0
      %p92 = por %p90, %p91
      %s93 = ssub.s32 %s22, %s41
      %s94 = ssub.s32 %s23, %s37
      %s95 = sor.u32 %s93, %s94
      %s96 = ssub.s32 %s24, %s33
      %s97 = sor.u32 %s95, %s96
      %p98 = scmp.eq.s32.totalorder %s97, 0
      %s100 = sadd.s32 %s99, 1
      %s101 = scalar_select %p98, %s99, %s100
      %p104 = pneg %p98
      %p105 = scmp.eq.s32.totalorder %s15, 1
      %p106 = por %p104, %p105
      %p107 = scmp.ne.s32.totalorder %s99, %s102
      %p108 = scmp.eq.s32.totalorder %s15, 0
      %p109 = por %p107, %p108
      %p110 = scmp.ne.s32.totalorder %s99, %s102
      %p111 = scmp.eq.s32.totalorder %s20, 1
      %p112 = por %p110, %p111
      %p113 = scmp.ne.s32.totalorder %s102, %s103
      %p114 = scmp.eq.s32.totalorder %s20, 0
      %p115 = por %p113, %p114
      %p116 = scmp.ne.s32.totalorder %s102, %s103
      %p117 = scmp.eq.s32.totalorder %s21, 1
      %p118 = por %p116, %p117
      %p120 = scmp.ne.s32.totalorder %s103, %s119
      %p121 = scmp.eq.s32.totalorder %s21, 0
      %p122 = por %p120, %p121
      %p123 = scmp.le.s32.totalorder 1, %s15
      %p124 = scmp.lt.s32.totalorder %s15, 3
      %p125 = pnand %p123, %p124
      %p126 = pneg %p125
      // Predicated region
      $region9: #{tpu_custom_call.1} parent=5 // pred_check
        _
      $region10: #{tpu_custom_call.1} parent=5 // pred_check_branch
        %128 = sbr.rel (%p125) target = $region12
      $region11: #{tpu_custom_call.1} parent=5 // pred_region
        %s129 = ssub.s32 %s15, 1
        // Predicated region
        $region13: #{tpu_custom_call.1} parent=11 // pred_check
          %p130 = pneg %p85
        $region14: #{tpu_custom_call.1} parent=11 // pred_check_branch
          %132 = sbr.rel (%p130) target = $region16
        $region15: #{tpu_custom_call.1} parent=11 // pred_region
          %s134 = ssub.s32 256, 256
          %135 = vsyncadd [#allocation6], %s134
          %s136 = sshll.u32 [#allocation5], 4
          %s137 = int_to_ptr.vmem [resolvable:$true] %s136
          %142 = dma.hbm_to_vmem [thread:$0]  %s1, 256, %s137, [#allocation6], 128, 128, 8
        $region16: #{tpu_custom_call.1} parent=11 // pred_fallthru
          _
      $region12: #{tpu_custom_call.1} parent=5 // pred_fallthru
        _
      %p143 = scmp.lt.s32.totalorder %s15, 2
      // Predicated region
      $region17: #{tpu_custom_call.1} parent=5 // pred_check
        %p144 = pneg %p143
      $region18: #{tpu_custom_call.1} parent=5 // pred_check_branch
        %146 = sbr.rel (%p144) target = $region20
      $region19: #{tpu_custom_call.1} parent=5 // pred_region
        // Predicated region
        $region21: #{tpu_custom_call.1} parent=19 // pred_check
          %p147 = pneg %p58
        $region22: #{tpu_custom_call.1} parent=19 // pred_check_branch
          %149 = sbr.rel (%p147) target = $region24
        $region23: #{tpu_custom_call.1} parent=19 // pred_region
          %s150 = sand.u32 %s48, 1
          %s151 = scalar_lea.sflag [#allocation3], %s150
          %s152 = sand.u32 %s48, 1
          %s153 = smul.addr %s152, 96
          %s154 = scalar_lea.vmem [#allocation2], %s153
          %s155 = smul.u32 4, %s23
          %s156 = smul.u32 3, %s24
          %s158 = ssub.s32 1536, 1536
          %159 = vsyncadd %s151, %s158
          %s160 = smul.addr %s155, 3
          %s161 = sadd.s32 %s156, %s160
          %s162 = smul.addr %s22, 12
          %s163 = sadd.s32 %s161, %s162
          %s164 = smul.addr %s163, 128
          %s165 = scalar_lea.hbm %s0, %s164
          %s166 = sshll.u32 %s154, 4
          %s167 = int_to_ptr.vmem [resolvable:$true] %s166
          %172 = dma.hbm_to_vmem [thread:$0]  %s165, 1536, %s167, %s151, 128, 128, 8
        $region24: #{tpu_custom_call.1} parent=19 // pred_fallthru
          _
      $region20: #{tpu_custom_call.1} parent=5 // pred_fallthru
        _
      %p173 = scmp.le.s32.totalorder 1, %s15
      %p174 = scmp.lt.s32.totalorder %s15, 3
      %p175 = pnand %p173, %p174
      %p176 = pneg %p175
      // Predicated region
      $region25: #{tpu_custom_call.1} parent=5 // pred_check
        _
      $region26: #{tpu_custom_call.1} parent=5 // pred_check_branch
        %178 = sbr.rel (%p175) target = $region28
      $region27: #{tpu_custom_call.1} parent=5 // pred_region
        %s179 = ssub.s32 %s15, 1
        %s180 = sand.u32 %s51, 1
        %s181 = scalar_lea.sflag [#allocation3], %s180
        %s182 = sand.u32 %s51, 1
        %s183 = smul.addr %s182, 96
        %s184 = scalar_lea.vmem [#allocation2], %s183
        // Predicated region
        $region29: #{tpu_custom_call.1} parent=27 // pred_check
          %p185 = pneg %p64
        $region30: #{tpu_custom_call.1} parent=27 // pred_check_branch
          %187 = sbr.rel (%p185) target = $region32
        $region31: #{tpu_custom_call.1} parent=27 // pred_region
          %188 = dma.done %s181, 1536
        $region32: #{tpu_custom_call.1} parent=27 // pred_fallthru
          _
        // Predicated region
        $region33: #{tpu_custom_call.1} parent=27 // pred_check
          %p189 = pneg %p85
        $region34: #{tpu_custom_call.1} parent=27 // pred_check_branch
          %191 = sbr.rel (%p189) target = $region36
        $region35: #{tpu_custom_call.1} parent=27 // pred_region
          %192 = dma.done [#allocation6], 256
        $region36: #{tpu_custom_call.1} parent=27 // pred_fallthru
          _
        %s193 = sand.u32 %s51, 1
        %s194 = scalar_lea.sflag [#allocation3], %s193
        %s195 = sand.u32 %s51, 1
        %s196 = smul.addr %s195, 96
        %s197 = scalar_lea.vmem [#allocation2], %s196
        %p198 = pneg %p64
        %p199 = pneg %p61
        %p200 = pneg %p85
        %p201 = pneg %p82
        %p202 = pneg %p115
        %p203 = pneg %p112
        %s204 = sand.u32 %s102, 1
        %s205 = scalar_lea.sflag [#allocation4], %s204
        %s206 = sand.u32 %s102, 1
        %s207 = smul.addr %s206, 384
        %s208 = scalar_lea.vmem [#allocation7], %s207
        %s209 = smul.u32 4, %s26
        %s210 = smul.u32 3, %s27
        %s211 = smul.u32 4, %s26
        %s212 = smul.u32 3, %s27
        %v213 = vld [vmem:[%s184] sm:$0xff]
        %v214 = vld [vmem:[%s184 + $0x8] sm:$0xff]
        %v215 = vld [vmem:[%s184 + $0x10] sm:$0xff]
        %v216 = vld [vmem:[%s184 + $0x18] sm:$0xff]
        %v217 = vld [vmem:[%s184 + $0x20] sm:$0xff]
        %v218 = vld [vmem:[%s184 + $0x28] sm:$0xff]
        %v219 = vld [vmem:[%s184 + $0x30] sm:$0xff]
        %v220 = vld [vmem:[%s184 + $0x38] sm:$0xff]
        %v221 = vld [vmem:[%s184 + $0x40] sm:$0xff]
        %v222 = vld [vmem:[%s184 + $0x48] sm:$0xff]
        %v223 = vld [vmem:[%s184 + $0x50] sm:$0xff]
        %v224 = vld [vmem:[%s184 + $0x58] sm:$0xff]
        %v225 = vld [vmem:[#allocation5] sm:$0xff]
        %v226 = vld [vmem:[#allocation5 + $0x8] sm:$0xff]
        %vm227 = vcmask 130048
        %v229 = vsel %vm227, %v213, 0
        %v232 = vsel %vm227, %v214, 0
        %v235 = vsel %vm227, %v215, 0
        %v238 = vsel %vm227, %v216, 0
        %v241 = vsel %vm227, %v217, 0
        %v244 = vsel %vm227, %v218, 0
        %v247 = vsel %vm227, %v219, 0
        %v250 = vsel %vm227, %v220, 0
        %v253 = vsel %vm227, %v221, 0
        %v256 = vsel %vm227, %v222, 0
        %v259 = vsel %vm227, %v223, 0
        %v262 = vsel %vm227, %v224, 0
        %264 = vmatprep.subr.mxu0 0.0
        %v265 = vand.u32 %v225, 4294901760
        %266 = vmatpush1.msra.mxu0 %v265
        %267 = vmatprep.subr.mxu0 0.0
        %v268 = vand.u32 %v226, 4294901760
        %269 = vmatpush1.msra.mxu0 %v268
        %270 = vmatprep.subr.mxu0 0.0
        %271 = vmatpush1.msra.mxu0 0.0
        %272 = vmatprep.subr.mxu0 0.0
        %273 = vmatpush1.msra.mxu0 0.0
        %274 = vmatprep.subr.mxu0 0.0
        %275 = vmatpush1.msra.mxu0 0.0
        %276 = vmatprep.subr.mxu0 0.0
        %277 = vmatpush1.msra.mxu0 0.0
        %278 = vmatprep.subr.mxu0 0.0
        %279 = vmatpush1.msra.mxu0 0.0
        %280 = vmatprep.subr.mxu0 0.0
        %281 = vmatpush1.msra.mxu0 0.0
        %282 = vmatprep.subr.mxu0 0.0
        %283 = vmatpush1.msra.mxu0 0.0
        %284 = vmatprep.subr.mxu0 0.0
        %285 = vmatpush1.msra.mxu0 0.0
        %286 = vmatprep.subr.mxu0 0.0
        %287 = vmatpush1.msra.mxu0 0.0
        %288 = vmatprep.subr.mxu0 0.0
        %289 = vmatpush1.msra.mxu0 0.0
        %290 = vmatprep.subr.mxu0 0.0
        %291 = vmatpush1.msra.mxu0 0.0
        %292 = vmatprep.subr.mxu0 0.0
        %293 = vmatpush1.msra.mxu0 0.0
        %294 = vmatprep.subr.mxu0 0.0
        %295 = vmatpush1.msra.mxu0 0.0
        %296 = vmatprep.subr.mxu0 0.0
        %297 = vmatpush1.msra.mxu0 0.0
        %298 = vmatprep.subr.mxu0 0.0
        %299 = vmatpush1.msra.mxu0 0.0
        %300 = vmatprep.subr.mxu0 0.0
        %301 = vmatpush1.msra.mxu0 0.0
        %302 = vmatprep.subr.mxu0 0.0
        %303 = vmatpush1.msra.mxu0 0.0
        %304 = vmatprep.subr.mxu0 0.0
        %305 = vmatpush1.msra.mxu0 0.0
        %306 = vmatprep.subr.mxu0 0.0
        %307 = vmatpush1.msra.mxu0 0.0
        %308 = vmatprep.subr.mxu0 0.0
        %309 = vmatpush1.msra.mxu0 0.0
        %310 = vmatprep.subr.mxu0 0.0
        %311 = vmatpush1.msra.mxu0 0.0
        %312 = vmatprep.subr.mxu0 0.0
        %313 = vmatpush1.msra.mxu0 0.0
        %314 = vmatprep.subr.mxu0 0.0
        %315 = vmatpush1.msra.mxu0 0.0
        %316 = vmatprep.subr.mxu0 0.0
        %317 = vmatpush1.msra.mxu0 0.0
        %318 = vmatprep.subr.mxu0 0.0
        %319 = vmatpush1.msra.mxu0 0.0
        %320 = vmatprep.subr.mxu0 0.0
        %321 = vmatpush1.msra.mxu0 0.0
        %322 = vmatprep.subr.mxu0 0.0
        %323 = vmatpush1.msra.mxu0 0.0
        %324 = vmatprep.subr.mxu0 0.0
        %325 = vmatpush1.msra.mxu0 0.0
        %326 = vmatprep.subr.mxu0 0.0
        %327 = vmatpush1.msra.mxu0 0.0
        %328 = vmatprep.subr.mxu0 0.0
        %329 = vmatpush1.msra.mxu0 0.0
        %330 = vmatprep.mubr.f32.mxu0 0.0
        %v331 = vand.u32 %v229, 4294901760
        %v332 = vsub.f32 %v229, %v331
        %v333 = vand.u32 %v332, 4294901760
        %v334 = vsub.f32 %v332, %v333
        %v335 = vand.u32 %v334, 4294901760
        %336 = vmatmul.mubr.f32.gmra.mrb[0].mxu0 %v335
        %v337 = vpop.f32.mrb[0].mxu0
        %v338 = vadd.f32 0.0, %v337
        %v339 = vpop.f32.mrb[0].mxu0
        %340 = vmatprep.mubr.f32.mxu0 0.0
        %v341 = vand.u32 %v232, 4294901760
        %v342 = vsub.f32 %v232, %v341
        %v343 = vand.u32 %v342, 4294901760
        %v344 = vsub.f32 %v342, %v343
        %v345 = vand.u32 %v344, 4294901760
        %346 = vmatmul.mubr.f32.gmra.mrb[0].mxu0 %v345
        %v347 = vpop.f32.mrb[0].mxu0
        %v348 = vadd.f32 0.0, %v347
        %v349 = vpop.f32.mrb[0].mxu0
        %350 = vmatprep.mubr.f32.mxu0 0.0
        %v351 = vand.u32 %v235, 4294901760
        %v352 = vsub.f32 %v235, %v351
        %v353 = vand.u32 %v352, 4294901760
        %v354 = vsub.f32 %v352, %v353
        %v355 = vand.u32 %v354, 4294901760
        %356 = vmatmul.mubr.f32.gmra.mrb[0].mxu0 %v355
        %v357 = vpop.f32.mrb[0].mxu0
        %v358 = vadd.f32 0.0, %v357
        %v359 = vpop.f32.mrb[0].mxu0
        %360 = vmatprep.mubr.f32.mxu0 0.0
        %v361 = vand.u32 %v238, 4294901760
        %v362 = vsub.f32 %v238, %v361
        %v363 = vand.u32 %v362, 4294901760
        %v364 = vsub.f32 %v362, %v363
        %v365 = vand.u32 %v364, 4294901760
        %366 = vmatmul.mubr.f32.gmra.mrb[0].mxu0 %v365
        %v367 = vpop.f32.mrb[0].mxu0
        %v368 = vadd.f32 0.0, %v367
        %v369 = vpop.f32.mrb[0].mxu0
        %370 = vmatprep.mubr.f32.mxu0 0.0
        %v371 = vand.u32 %v241, 4294901760
        %v372 = vsub.f32 %v241, %v371
        %v373 = vand.u32 %v372, 4294901760
        %v374 = vsub.f32 %v372, %v373
        %v375 = vand.u32 %v374, 4294901760
        %376 = vmatmul.mubr.f32.gmra.mrb[0].mxu0 %v375
        %v377 = vpop.f32.mrb[0].mxu0
        %v378 = vadd.f32 0.0, %v377
        %v379 = vpop.f32.mrb[0].mxu0
        %380 = vmatprep.mubr.f32.mxu0 0.0
        %v381 = vand.u32 %v244, 4294901760
        %v382 = vsub.f32 %v244, %v381
        %v383 = vand.u32 %v382, 4294901760
        %v384 = vsub.f32 %v382, %v383
        %v385 = vand.u32 %v384, 4294901760
        %386 = vmatmul.mubr.f32.gmra.mrb[0].mxu0 %v385
        %v387 = vpop.f32.mrb[0].mxu0
        %v388 = vadd.f32 0.0, %v387
        %v389 = vpop.f32.mrb[0].mxu0
        %390 = vmatprep.mubr.f32.mxu0 0.0
        %v391 = vand.u32 %v247, 4294901760
        %v392 = vsub.f32 %v247, %v391
        %v393 = vand.u32 %v392, 4294901760
        %v394 = vsub.f32 %v392, %v393
        %v395 = vand.u32 %v394, 4294901760
        %396 = vmatmul.mubr.f32.gmra.mrb[0].mxu0 %v395
        %v397 = vpop.f32.mrb[0].mxu0
        %v398 = vadd.f32 0.0, %v397
        %v399 = vpop.f32.mrb[0].mxu0
        %400 = vmatprep.mubr.f32.mxu0 0.0
        %v401 = vand.u32 %v250, 4294901760
        %v402 = vsub.f32 %v250, %v401
        %v403 = vand.u32 %v402, 4294901760
        %v404 = vsub.f32 %v402, %v403
        %v405 = vand.u32 %v404, 4294901760
        %406 = vmatmul.mubr.f32.gmra.mrb[0].mxu0 %v405
        %v407 = vpop.f32.mrb[0].mxu0
        %v408 = vadd.f32 0.0, %v407
        %v409 = vpop.f32.mrb[0].mxu0
        %410 = vmatprep.mubr.f32.mxu0 0.0
        %v411 = vand.u32 %v253, 4294901760
        %v412 = vsub.f32 %v253, %v411
        %v413 = vand.u32 %v412, 4294901760
        %v414 = vsub.f32 %v412, %v413
        %v415 = vand.u32 %v414, 4294901760
        %416 = vmatmul.mubr.f32.gmra.mrb[0].mxu0 %v415
        %v417 = vpop.f32.mrb[0].mxu0
        %v418 = vadd.f32 0.0, %v417
        %v419 = vpop.f32.mrb[0].mxu0
        %420 = vmatprep.mubr.f32.mxu0 0.0
        %v421 = vand.u32 %v256, 4294901760
        %v422 = vsub.f32 %v256, %v421
        %v423 = vand.u32 %v422, 4294901760
        %v424 = vsub.f32 %v422, %v423
        %v425 = vand.u32 %v424, 4294901760
        %426 = vmatmul.mubr.f32.gmra.mrb[0].mxu0 %v425
        %v427 = vpop.f32.mrb[0].mxu0
        %v428 = vadd.f32 0.0, %v427
        %v429 = vpop.f32.mrb[0].mxu0
        %430 = vmatprep.mubr.f32.mxu0 0.0
        %v431 = vand.u32 %v259, 4294901760
        %v432 = vsub.f32 %v259, %v431
        %v433 = vand.u32 %v432, 4294901760
        %v434 = vsub.f32 %v432, %v433
        %v435 = vand.u32 %v434, 4294901760
        %436 = vmatmul.mubr.f32.gmra.mrb[0].mxu0 %v435
        %v437 = vpop.f32.mrb[0].mxu0
        %v438 = vadd.f32 0.0, %v437
        %v439 = vpop.f32.mrb[0].mxu0
        %440 = vmatprep.mubr.f32.mxu0 0.0
        %v441 = vand.u32 %v262, 4294901760
        %v442 = vsub.f32 %v262, %v441
        %v443 = vand.u32 %v442, 4294901760
        %v444 = vsub.f32 %v442, %v443
        %v445 = vand.u32 %v444, 4294901760
        %446 = vmatmul.mubr.f32.gmra.mrb[0].mxu0 %v445
        %v447 = vpop.f32.mrb[0].mxu0
        %v448 = vadd.f32 0.0, %v447
        %v449 = vpop.f32.mrb[0].mxu0
        %450 = vdwg.mxu0
        %451 = vmatprep.subr.mxu0 0.0
        %v452 = vand.u32 %v225, 4294901760
        %v453 = vsub.f32 %v225, %v452
        %v454 = vand.u32 %v453, 4294901760
        %v455 = vsub.f32 %v453, %v454
        %v456 = vand.u32 %v455, 4294901760
        %457 = vmatpush1.msra.mxu0 %v456
        %458 = vmatprep.subr.mxu0 0.0
        %v459 = vand.u32 %v226, 4294901760
        %v460 = vsub.f32 %v226, %v459
        %v461 = vand.u32 %v460, 4294901760
        %v462 = vsub.f32 %v460, %v461
        %v463 = vand.u32 %v462, 4294901760
        %464 = vmatpush1.msra.mxu0 %v463
        %465 = vmatprep.subr.mxu0 0.0
        %466 = vmatpush1.msra.mxu0 0.0
        %467 = vmatprep.subr.mxu0 0.0
        %468 = vmatpush1.msra.mxu0 0.0
        %469 = vmatprep.subr.mxu0 0.0
        %470 = vmatpush1.msra.mxu0 0.0
        %471 = vmatprep.subr.mxu0 0.0
        %472 = vmatpush1.msra.mxu0 0.0
        %473 = vmatprep.subr.mxu0 0.0
        %474 = vmatpush1.msra.mxu0 0.0
        %475 = vmatprep.subr.mxu0 0.0
        %476 = vmatpush1.msra.mxu0 0.0
        %477 = vmatprep.subr.mxu0 0.0
        %478 = vmatpush1.msra.mxu0 0.0
        %479 = vmatprep.subr.mxu0 0.0
        %480 = vmatpush1.msra.mxu0 0.0
        %481 = vmatprep.subr.mxu0 0.0
        %482 = vmatpush1.msra.mxu0 0.0
        %483 = vmatprep.subr.mxu0 0.0
        %484 = vmatpush1.msra.mxu0 0.0
        %485 = vmatprep.subr.mxu0 0.0
        %486 = vmatpush1.msra.mxu0 0.0
        %487 = vmatprep.subr.mxu0 0.0
        %488 = vmatpush1.msra.mxu0 0.0
        %489 = vmatprep.subr.mxu0 0.0
        %490 = vmatpush1.msra.mxu0 0.0
        %491 = vmatprep.subr.mxu0 0.0
        %492 = vmatpush1.msra.mxu0 0.0
        %493 = vmatprep.subr.mxu0 0.0
        %494 = vmatpush1.msra.mxu0 0.0
        %495 = vmatprep.subr.mxu0 0.0
        %496 = vmatpush1.msra.mxu0 0.0
        %497 = vmatprep.subr.mxu0 0.0
        %498 = vmatpush1.msra.mxu0 0.0
        %499 = vmatprep.subr.mxu0 0.0
        %500 = vmatpush1.msra.mxu0 0.0
        %501 = vmatprep.subr.mxu0 0.0
        %502 = vmatpush1.msra.mxu0 0.0
        %503 = vmatprep.subr.mxu0 0.0
        %504 = vmatpush1.msra.mxu0 0.0
        %505 = vmatprep.subr.mxu0 0.0
        %506 = vmatpush1.msra.mxu0 0.0
        %507 = vmatprep.subr.mxu0 0.0
        %508 = vmatpush1.msra.mxu0 0.0
        %509 = vmatprep.subr.mxu0 0.0
        %510 = vmatpush1.msra.mxu0 0.0
        %511 = vmatprep.subr.mxu0 0.0
        %512 = vmatpush1.msra.mxu0 0.0
        %513 = vmatprep.subr.mxu0 0.0
        %514 = vmatpush1.msra.mxu0 0.0
        %515 = vmatprep.subr.mxu0 0.0
        %516 = vmatpush1.msra.mxu0 0.0
        %517 = vmatprep.subr.mxu0 0.0
        %518 = vmatpush1.msra.mxu0 0.0
        %519 = vmatprep.subr.mxu0 0.0
        %520 = vmatpush1.msra.mxu0 0.0
        %521 = vmatprep.subr.mxu0 0.0
        %522 = vmatpush1.msra.mxu0 0.0
        %523 = vmatprep.subr.mxu0 0.0
        %524 = vmatpush1.msra.mxu0 0.0
        %525 = vmatprep.mubr.f32.mxu0 0.0
        %v526 = vand.u32 %v229, 4294901760
        %527 = vmatmul.mubr.f32.gmra.mrb[0].mxu0 %v526
        %v528 = vpop.f32.mrb[0].mxu0
        %v529 = vadd.f32 %v338, %v528
        %v530 = vpop.f32.mrb[0].mxu0
        %531 = vmatprep.mubr.f32.mxu0 0.0
        %v532 = vand.u32 %v232, 4294901760
        %533 = vmatmul.mubr.f32.gmra.mrb[0].mxu0 %v532
        %v534 = vpop.f32.mrb[0].mxu0
        %v535 = vadd.f32 %v348, %v534
        %v536 = vpop.f32.mrb[0].mxu0
        %537 = vmatprep.mubr.f32.mxu0 0.0
        %v538 = vand.u32 %v235, 4294901760
        %539 = vmatmul.mubr.f32.gmra.mrb[0].mxu0 %v538
        %v540 = vpop.f32.mrb[0].mxu0
        %v541 = vadd.f32 %v358, %v540
        %v542 = vpop.f32.mrb[0].mxu0
        %543 = vmatprep.mubr.f32.mxu0 0.0
        %v544 = vand.u32 %v238, 4294901760
        %545 = vmatmul.mubr.f32.gmra.mrb[0].mxu0 %v544
        %v546 = vpop.f32.mrb[0].mxu0
        %v547 = vadd.f32 %v368, %v546
        %v548 = vpop.f32.mrb[0].mxu0
        %549 = vmatprep.mubr.f32.mxu0 0.0
        %v550 = vand.u32 %v241, 4294901760
        %551 = vmatmul.mubr.f32.gmra.mrb[0].mxu0 %v550
        %v552 = vpop.f32.mrb[0].mxu0
        %v553 = vadd.f32 %v378, %v552
        %v554 = vpop.f32.mrb[0].mxu0
        %555 = vmatprep.mubr.f32.mxu0 0.0
        %v556 = vand.u32 %v244, 4294901760
        %557 = vmatmul.mubr.f32.gmra.mrb[0].mxu0 %v556
        %v558 = vpop.f32.mrb[0].mxu0
        %v559 = vadd.f32 %v388, %v558
        %v560 = vpop.f32.mrb[0].mxu0
        %561 = vmatprep.mubr.f32.mxu0 0.0
        %v562 = vand.u32 %v247, 4294901760
        %563 = vmatmul.mubr.f32.gmra.mrb[0].mxu0 %v562
        %v564 = vpop.f32.mrb[0].mxu0
        %v565 = vadd.f32 %v398, %v564
        %v566 = vpop.f32.mrb[0].mxu0
        %567 = vmatprep.mubr.f32.mxu0 0.0
        %v568 = vand.u32 %v250, 4294901760
        %569 = vmatmul.mubr.f32.gmra.mrb[0].mxu0 %v568
        %v570 = vpop.f32.mrb[0].mxu0
        %v571 = vadd.f32 %v408, %v570
        %v572 = vpop.f32.mrb[0].mxu0
        %573 = vmatprep.mubr.f32.mxu0 0.0
        %v574 = vand.u32 %v253, 4294901760
        %575 = vmatmul.mubr.f32.gmra.mrb[0].mxu0 %v574
        %v576 = vpop.f32.mrb[0].mxu0
        %v577 = vadd.f32 %v418, %v576
        %v578 = vpop.f32.mrb[0].mxu0
        %579 = vmatprep.mubr.f32.mxu0 0.0
        %v580 = vand.u32 %v256, 4294901760
        %581 = vmatmul.mubr.f32.gmra.mrb[0].mxu0 %v580
        %v582 = vpop.f32.mrb[0].mxu0
        %v583 = vadd.f32 %v428, %v582
        %v584 = vpop.f32.mrb[0].mxu0
        %585 = vmatprep.mubr.f32.mxu0 0.0
        %v586 = vand.u32 %v259, 4294901760
        %587 = vmatmul.mubr.f32.gmra.mrb[0].mxu0 %v586
        %v588 = vpop.f32.mrb[0].mxu0
        %v589 = vadd.f32 %v438, %v588
        %v590 = vpop.f32.mrb[0].mxu0
        %591 = vmatprep.mubr.f32.mxu0 0.0
        %v592 = vand.u32 %v262, 4294901760
        %593 = vmatmul.mubr.f32.gmra.mrb[0].mxu0 %v592
        %v594 = vpop.f32.mrb[0].mxu0
        %v595 = vadd.f32 %v448, %v594
        %v596 = vpop.f32.mrb[0].mxu0
        %597 = vdwg.mxu0
        %598 = vmatprep.subr.mxu0 0.0
        %v599 = vand.u32 %v225, 4294901760
        %v600 = vsub.f32 %v225, %v599
        %601 = vmatpush1.msra.mxu0 %v600
        %602 = vmatprep.subr.mxu0 0.0
        %v603 = vand.u32 %v226, 4294901760
        %v604 = vsub.f32 %v226, %v603
        %605 = vmatpush1.msra.mxu0 %v604
        %606 = vmatprep.subr.mxu0 0.0
        %607 = vmatpush1.msra.mxu0 0.0
        %608 = vmatprep.subr.mxu0 0.0
        %609 = vmatpush1.msra.mxu0 0.0
        %610 = vmatprep.subr.mxu0 0.0
        %611 = vmatpush1.msra.mxu0 0.0
        %612 = vmatprep.subr.mxu0 0.0
        %613 = vmatpush1.msra.mxu0 0.0
        %614 = vmatprep.subr.mxu0 0.0
        %615 = vmatpush1.msra.mxu0 0.0
        %616 = vmatprep.subr.mxu0 0.0
        %617 = vmatpush1.msra.mxu0 0.0
        %618 = vmatprep.subr.mxu0 0.0
        %619 = vmatpush1.msra.mxu0 0.0
        %620 = vmatprep.subr.mxu0 0.0
        %621 = vmatpush1.msra.mxu0 0.0
        %622 = vmatprep.subr.mxu0 0.0
        %623 = vmatpush1.msra.mxu0 0.0
        %624 = vmatprep.subr.mxu0 0.0
        %625 = vmatpush1.msra.mxu0 0.0
        %626 = vmatprep.subr.mxu0 0.0
        %627 = vmatpush1.msra.mxu0 0.0
        %628 = vmatprep.subr.mxu0 0.0
        %629 = vmatpush1.msra.mxu0 0.0
        %630 = vmatprep.subr.mxu0 0.0
        %631 = vmatpush1.msra.mxu0 0.0
        %632 = vmatprep.subr.mxu0 0.0
        %633 = vmatpush1.msra.mxu0 0.0
        %634 = vmatprep.subr.mxu0 0.0
        %635 = vmatpush1.msra.mxu0 0.0
        %636 = vmatprep.subr.mxu0 0.0
        %637 = vmatpush1.msra.mxu0 0.0
        %638 = vmatprep.subr.mxu0 0.0
        %639 = vmatpush1.msra.mxu0 0.0
        %640 = vmatprep.subr.mxu0 0.0
        %641 = vmatpush1.msra.mxu0 0.0
        %642 = vmatprep.subr.mxu0 0.0
        %643 = vmatpush1.msra.mxu0 0.0
        %644 = vmatprep.subr.mxu0 0.0
        %645 = vmatpush1.msra.mxu0 0.0
        %646 = vmatprep.subr.mxu0 0.0
        %647 = vmatpush1.msra.mxu0 0.0
        %648 = vmatprep.subr.mxu0 0.0
        %649 = vmatpush1.msra.mxu0 0.0
        %650 = vmatprep.subr.mxu0 0.0
        %651 = vmatpush1.msra.mxu0 0.0
        %652 = vmatprep.subr.mxu0 0.0
        %653 = vmatpush1.msra.mxu0 0.0
        %654 = vmatprep.subr.mxu0 0.0
        %655 = vmatpush1.msra.mxu0 0.0
        %656 = vmatprep.subr.mxu0 0.0
        %657 = vmatpush1.msra.mxu0 0.0
        %658 = vmatprep.subr.mxu0 0.0
        %659 = vmatpush1.msra.mxu0 0.0
        %660 = vmatprep.subr.mxu0 0.0
        %661 = vmatpush1.msra.mxu0 0.0
        %662 = vmatprep.subr.mxu0 0.0
        %663 = vmatpush1.msra.mxu0 0.0
        %664 = vmatprep.subr.mxu0 0.0
        %665 = vmatpush1.msra.mxu0 0.0
        %666 = vmatprep.mubr.f32.mxu0 0.0
        %v667 = vand.u32 %v229, 4294901760
        %v668 = vsub.f32 %v229, %v667
        %669 = vmatmul.mubr.f32.gmra.mrb[0].mxu0 %v668
        %v670 = vpop.f32.mrb[0].mxu0
        %v671 = vadd.f32 %v529, %v670
        %v672 = vpop.f32.mrb[0].mxu0
        %673 = vmatprep.mubr.f32.mxu0 0.0
        %v674 = vand.u32 %v232, 4294901760
        %v675 = vsub.f32 %v232, %v674
        %676 = vmatmul.mubr.f32.gmra.mrb[0].mxu0 %v675
        %v677 = vpop.f32.mrb[0].mxu0
        %v678 = vadd.f32 %v535, %v677
        %v679 = vpop.f32.mrb[0].mxu0
        %680 = vmatprep.mubr.f32.mxu0 0.0
        %v681 = vand.u32 %v235, 4294901760
        %v682 = vsub.f32 %v235, %v681
        %683 = vmatmul.mubr.f32.gmra.mrb[0].mxu0 %v682
        %v684 = vpop.f32.mrb[0].mxu0
        %v685 = vadd.f32 %v541, %v684
        %v686 = vpop.f32.mrb[0].mxu0
        %687 = vmatprep.mubr.f32.mxu0 0.0
        %v688 = vand.u32 %v238, 4294901760
        %v689 = vsub.f32 %v238, %v688
        %690 = vmatmul.mubr.f32.gmra.mrb[0].mxu0 %v689
        %v691 = vpop.f32.mrb[0].mxu0
        %v692 = vadd.f32 %v547, %v691
        %v693 = vpop.f32.mrb[0].mxu0
        %694 = vmatprep.mubr.f32.mxu0 0.0
        %v695 = vand.u32 %v241, 4294901760
        %v696 = vsub.f32 %v241, %v695
        %697 = vmatmul.mubr.f32.gmra.mrb[0].mxu0 %v696
        %v698 = vpop.f32.mrb[0].mxu0
        %v699 = vadd.f32 %v553, %v698
        %v700 = vpop.f32.mrb[0].mxu0
        %701 = vmatprep.mubr.f32.mxu0 0.0
        %v702 = vand.u32 %v244, 4294901760
        %v703 = vsub.f32 %v244, %v702
        %704 = vmatmul.mubr.f32.gmra.mrb[0].mxu0 %v703
        %v705 = vpop.f32.mrb[0].mxu0
        %v706 = vadd.f32 %v559, %v705
        %v707 = vpop.f32.mrb[0].mxu0
        %708 = vmatprep.mubr.f32.mxu0 0.0
        %v709 = vand.u32 %v247, 4294901760
        %v710 = vsub.f32 %v247, %v709
        %711 = vmatmul.mubr.f32.gmra.mrb[0].mxu0 %v710
        %v712 = vpop.f32.mrb[0].mxu0
        %v713 = vadd.f32 %v565, %v712
        %v714 = vpop.f32.mrb[0].mxu0
        %715 = vmatprep.mubr.f32.mxu0 0.0
        %v716 = vand.u32 %v250, 4294901760
        %v717 = vsub.f32 %v250, %v716
        %718 = vmatmul.mubr.f32.gmra.mrb[0].mxu0 %v717
        %v719 = vpop.f32.mrb[0].mxu0
        %v720 = vadd.f32 %v571, %v719
        %v721 = vpop.f32.mrb[0].mxu0
        %722 = vmatprep.mubr.f32.mxu0 0.0
        %v723 = vand.u32 %v253, 4294901760
        %v724 = vsub.f32 %v253, %v723
        %725 = vmatmul.mubr.f32.gmra.mrb[0].mxu0 %v724
        %v726 = vpop.f32.mrb[0].mxu0
        %v727 = vadd.f32 %v577, %v726
        %v728 = vpop.f32.mrb[0].mxu0
        %729 = vmatprep.mubr.f32.mxu0 0.0
        %v730 = vand.u32 %v256, 4294901760
        %v731 = vsub.f32 %v256, %v730
        %732 = vmatmul.mubr.f32.gmra.mrb[0].mxu0 %v731
        %v733 = vpop.f32.mrb[0].mxu0
        %v734 = vadd.f32 %v583, %v733
        %v735 = vpop.f32.mrb[0].mxu0
        %736 = vmatprep.mubr.f32.mxu0 0.0
        %v737 = vand.u32 %v259, 4294901760
        %v738 = vsub.f32 %v259, %v737
        %739 = vmatmul.mubr.f32.gmra.mrb[0].mxu0 %v738
        %v740 = vpop.f32.mrb[0].mxu0
        %v741 = vadd.f32 %v589, %v740
        %v742 = vpop.f32.mrb[0].mxu0
        %743 = vmatprep.mubr.f32.mxu0 0.0
        %v744 = vand.u32 %v262, 4294901760
        %v745 = vsub.f32 %v262, %v744
        %746 = vmatmul.mubr.f32.gmra.mrb[0].mxu0 %v745
        %v747 = vpop.f32.mrb[0].mxu0
        %v748 = vadd.f32 %v595, %v747
        %v749 = vpop.f32.mrb[0].mxu0
        %750 = vdwg.mxu0
        %751 = vmatprep.subr.mxu0 0.0
        %v752 = vand.u32 %v225, 4294901760
        %753 = vmatpush1.msra.mxu0 %v752
        %754 = vmatprep.subr.mxu0 0.0
        %v755 = vand.u32 %v226, 4294901760
        %756 = vmatpush1.msra.mxu0 %v755
        %757 = vmatprep.subr.mxu0 0.0
        %758 = vmatpush1.msra.mxu0 0.0
        %759 = vmatprep.subr.mxu0 0.0
        %760 = vmatpush1.msra.mxu0 0.0
        %761 = vmatprep.subr.mxu0 0.0
        %762 = vmatpush1.msra.mxu0 0.0
        %763 = vmatprep.subr.mxu0 0.0
        %764 = vmatpush1.msra.mxu0 0.0
        %765 = vmatprep.subr.mxu0 0.0
        %766 = vmatpush1.msra.mxu0 0.0
        %767 = vmatprep.subr.mxu0 0.0
        %768 = vmatpush1.msra.mxu0 0.0
        %769 = vmatprep.subr.mxu0 0.0
        %770 = vmatpush1.msra.mxu0 0.0
        %771 = vmatprep.subr.mxu0 0.0
        %772 = vmatpush1.msra.mxu0 0.0
        %773 = vmatprep.subr.mxu0 0.0
        %774 = vmatpush1.msra.mxu0 0.0
        %775 = vmatprep.subr.mxu0 0.0
        %776 = vmatpush1.msra.mxu0 0.0
        %777 = vmatprep.subr.mxu0 0.0
        %778 = vmatpush1.msra.mxu0 0.0
        %779 = vmatprep.subr.mxu0 0.0
        %780 = vmatpush1.msra.mxu0 0.0
        %781 = vmatprep.subr.mxu0 0.0
        %782 = vmatpush1.msra.mxu0 0.0
        %783 = vmatprep.subr.mxu0 0.0
        %784 = vmatpush1.msra.mxu0 0.0
        %785 = vmatprep.subr.mxu0 0.0
        %786 = vmatpush1.msra.mxu0 0.0
        %787 = vmatprep.subr.mxu0 0.0
        %788 = vmatpush1.msra.mxu0 0.0
        %789 = vmatprep.subr.mxu0 0.0
        %790 = vmatpush1.msra.mxu0 0.0
        %791 = vmatprep.subr.mxu0 0.0
        %792 = vmatpush1.msra.mxu0 0.0
        %793 = vmatprep.subr.mxu0 0.0
        %794 = vmatpush1.msra.mxu0 0.0
        %795 = vmatprep.subr.mxu0 0.0
        %796 = vmatpush1.msra.mxu0 0.0
        %797 = vmatprep.subr.mxu0 0.0
        %798 = vmatpush1.msra.mxu0 0.0
        %799 = vmatprep.subr.mxu0 0.0
        %800 = vmatpush1.msra.mxu0 0.0
        %801 = vmatprep.subr.mxu0 0.0
        %802 = vmatpush1.msra.mxu0 0.0
        %803 = vmatprep.subr.mxu0 0.0
        %804 = vmatpush1.msra.mxu0 0.0
        %805 = vmatprep.subr.mxu0 0.0
        %806 = vmatpush1.msra.mxu0 0.0
        %807 = vmatprep.subr.mxu0 0.0
        %808 = vmatpush1.msra.mxu0 0.0
        %809 = vmatprep.subr.mxu0 0.0
        %810 = vmatpush1.msra.mxu0 0.0
        %811 = vmatprep.subr.mxu0 0.0
        %812 = vmatpush1.msra.mxu0 0.0
        %813 = vmatprep.subr.mxu0 0.0
        %814 = vmatpush1.msra.mxu0 0.0
        %815 = vmatprep.subr.mxu0 0.0
        %816 = vmatpush1.msra.mxu0 0.0
        %817 = vmatprep.mubr.f32.mxu0 0.0
        %v818 = vand.u32 %v229, 4294901760
        %v819 = vsub.f32 %v229, %v818
        %v820 = vand.u32 %v819, 4294901760
        %821 = vmatmul.mubr.f32.gmra.mrb[0].mxu0 %v820
        %v822 = vpop.f32.mrb[0].mxu0
        %v823 = vadd.f32 %v671, %v822
        %v824 = vpop.f32.mrb[0].mxu0
        %825 = vmatprep.mubr.f32.mxu0 0.0
        %v826 = vand.u32 %v232, 4294901760
        %v827 = vsub.f32 %v232, %v826
        %v828 = vand.u32 %v827, 4294901760
        %829 = vmatmul.mubr.f32.gmra.mrb[0].mxu0 %v828
        %v830 = vpop.f32.mrb[0].mxu0
        %v831 = vadd.f32 %v678, %v830
        %v832 = vpop.f32.mrb[0].mxu0
        %833 = vmatprep.mubr.f32.mxu0 0.0
        %v834 = vand.u32 %v235, 4294901760
        %v835 = vsub.f32 %v235, %v834
        %v836 = vand.u32 %v835, 4294901760
        %837 = vmatmul.mubr.f32.gmra.mrb[0].mxu0 %v836
        %v838 = vpop.f32.mrb[0].mxu0
        %v839 = vadd.f32 %v685, %v838
        %v840 = vpop.f32.mrb[0].mxu0
        %841 = vmatprep.mubr.f32.mxu0 0.0
        %v842 = vand.u32 %v238, 4294901760
        %v843 = vsub.f32 %v238, %v842
        %v844 = vand.u32 %v843, 4294901760
        %845 = vmatmul.mubr.f32.gmra.mrb[0].mxu0 %v844
        %v846 = vpop.f32.mrb[0].mxu0
        %v847 = vadd.f32 %v692, %v846
        %v848 = vpop.f32.mrb[0].mxu0
        %849 = vmatprep.mubr.f32.mxu0 0.0
        %v850 = vand.u32 %v241, 4294901760
        %v851 = vsub.f32 %v241, %v850
        %v852 = vand.u32 %v851, 4294901760
        %853 = vmatmul.mubr.f32.gmra.mrb[0].mxu0 %v852
        %v854 = vpop.f32.mrb[0].mxu0
        %v855 = vadd.f32 %v699, %v854
        %v856 = vpop.f32.mrb[0].mxu0
        %857 = vmatprep.mubr.f32.mxu0 0.0
        %v858 = vand.u32 %v244, 4294901760
        %v859 = vsub.f32 %v244, %v858
        %v860 = vand.u32 %v859, 4294901760
        %861 = vmatmul.mubr.f32.gmra.mrb[0].mxu0 %v860
        %v862 = vpop.f32.mrb[0].mxu0
        %v863 = vadd.f32 %v706, %v862
        %v864 = vpop.f32.mrb[0].mxu0
        %865 = vmatprep.mubr.f32.mxu0 0.0
        %v866 = vand.u32 %v247, 4294901760
        %v867 = vsub.f32 %v247, %v866
        %v868 = vand.u32 %v867, 4294901760
        %869 = vmatmul.mubr.f32.gmra.mrb[0].mxu0 %v868
        %v870 = vpop.f32.mrb[0].mxu0
        %v871 = vadd.f32 %v713, %v870
        %v872 = vpop.f32.mrb[0].mxu0
        %873 = vmatprep.mubr.f32.mxu0 0.0
        %v874 = vand.u32 %v250, 4294901760
        %v875 = vsub.f32 %v250, %v874
        %v876 = vand.u32 %v875, 4294901760
        %877 = vmatmul.mubr.f32.gmra.mrb[0].mxu0 %v876
        %v878 = vpop.f32.mrb[0].mxu0
        %v879 = vadd.f32 %v720, %v878
        %v880 = vpop.f32.mrb[0].mxu0
        %881 = vmatprep.mubr.f32.mxu0 0.0
        %v882 = vand.u32 %v253, 4294901760
        %v883 = vsub.f32 %v253, %v882
        %v884 = vand.u32 %v883, 4294901760
        %885 = vmatmul.mubr.f32.gmra.mrb[0].mxu0 %v884
        %v886 = vpop.f32.mrb[0].mxu0
        %v887 = vadd.f32 %v727, %v886
        %v888 = vpop.f32.mrb[0].mxu0
        %889 = vmatprep.mubr.f32.mxu0 0.0
        %v890 = vand.u32 %v256, 4294901760
        %v891 = vsub.f32 %v256, %v890
        %v892 = vand.u32 %v891, 4294901760
        %893 = vmatmul.mubr.f32.gmra.mrb[0].mxu0 %v892
        %v894 = vpop.f32.mrb[0].mxu0
        %v895 = vadd.f32 %v734, %v894
        %v896 = vpop.f32.mrb[0].mxu0
        %897 = vmatprep.mubr.f32.mxu0 0.0
        %v898 = vand.u32 %v259, 4294901760
        %v899 = vsub.f32 %v259, %v898
        %v900 = vand.u32 %v899, 4294901760
        %901 = vmatmul.mubr.f32.gmra.mrb[0].mxu0 %v900
        %v902 = vpop.f32.mrb[0].mxu0
        %v903 = vadd.f32 %v741, %v902
        %v904 = vpop.f32.mrb[0].mxu0
        %905 = vmatprep.mubr.f32.mxu0 0.0
        %v906 = vand.u32 %v262, 4294901760
        %v907 = vsub.f32 %v262, %v906
        %v908 = vand.u32 %v907, 4294901760
        %909 = vmatmul.mubr.f32.gmra.mrb[0].mxu0 %v908
        %v910 = vpop.f32.mrb[0].mxu0
        %v911 = vadd.f32 %v748, %v910
        %v912 = vpop.f32.mrb[0].mxu0
        %913 = vdwg.mxu0
        %914 = vmatprep.subr.mxu0 0.0
        %v915 = vand.u32 %v225, 4294901760
        %v916 = vsub.f32 %v225, %v915
        %v917 = vand.u32 %v916, 4294901760
        %918 = vmatpush1.msra.mxu0 %v917
        %919 = vmatprep.subr.mxu0 0.0
        %v920 = vand.u32 %v226, 4294901760
        %v921 = vsub.f32 %v226, %v920
        %v922 = vand.u32 %v921, 4294901760
        %923 = vmatpush1.msra.mxu0 %v922
        %924 = vmatprep.subr.mxu0 0.0
        %925 = vmatpush1.msra.mxu0 0.0
        %926 = vmatprep.subr.mxu0 0.0
        %927 = vmatpush1.msra.mxu0 0.0
        %928 = vmatprep.subr.mxu0 0.0
        %929 = vmatpush1.msra.mxu0 0.0
        %930 = vmatprep.subr.mxu0 0.0
        %931 = vmatpush1.msra.mxu0 0.0
        %932 = vmatprep.subr.mxu0 0.0
        %933 = vmatpush1.msra.mxu0 0.0
        %934 = vmatprep.subr.mxu0 0.0
        %935 = vmatpush1.msra.mxu0 0.0
        %936 = vmatprep.subr.mxu0 0.0
        %937 = vmatpush1.msra.mxu0 0.0
        %938 = vmatprep.subr.mxu0 0.0
        %939 = vmatpush1.msra.mxu0 0.0
        %940 = vmatprep.subr.mxu0 0.0
        %941 = vmatpush1.msra.mxu0 0.0
        %942 = vmatprep.subr.mxu0 0.0
        %943 = vmatpush1.msra.mxu0 0.0
        %944 = vmatprep.subr.mxu0 0.0
        %945 = vmatpush1.msra.mxu0 0.0
        %946 = vmatprep.subr.mxu0 0.0
        %947 = vmatpush1.msra.mxu0 0.0
        %948 = vmatprep.subr.mxu0 0.0
        %949 = vmatpush1.msra.mxu0 0.0
        %950 = vmatprep.subr.mxu0 0.0
        %951 = vmatpush1.msra.mxu0 0.0
        %952 = vmatprep.subr.mxu0 0.0
        %953 = vmatpush1.msra.mxu0 0.0
        %954 = vmatprep.subr.mxu0 0.0
        %955 = vmatpush1.msra.mxu0 0.0
        %956 = vmatprep.subr.mxu0 0.0
        %957 = vmatpush1.msra.mxu0 0.0
        %958 = vmatprep.subr.mxu0 0.0
        %959 = vmatpush1.msra.mxu0 0.0
        %960 = vmatprep.subr.mxu0 0.0
        %961 = vmatpush1.msra.mxu0 0.0
        %962 = vmatprep.subr.mxu0 0.0
        %963 = vmatpush1.msra.mxu0 0.0
        %964 = vmatprep.subr.mxu0 0.0
        %965 = vmatpush1.msra.mxu0 0.0
        %966 = vmatprep.subr.mxu0 0.0
        %967 = vmatpush1.msra.mxu0 0.0
        %968 = vmatprep.subr.mxu0 0.0
        %969 = vmatpush1.msra.mxu0 0.0
        %970 = vmatprep.subr.mxu0 0.0
        %971 = vmatpush1.msra.mxu0 0.0
        %972 = vmatprep.subr.mxu0 0.0
        %973 = vmatpush1.msra.mxu0 0.0
        %974 = vmatprep.subr.mxu0 0.0
        %975 = vmatpush1.msra.mxu0 0.0
        %976 = vmatprep.subr.mxu0 0.0
        %977 = vmatpush1.msra.mxu0 0.0
        %978 = vmatprep.subr.mxu0 0.0
        %979 = vmatpush1.msra.mxu0 0.0
        %980 = vmatprep.subr.mxu0 0.0
        %981 = vmatpush1.msra.mxu0 0.0
        %982 = vmatprep.subr.mxu0 0.0
        %983 = vmatpush1.msra.mxu0 0.0
        %984 = vmatprep.mubr.f32.mxu0 0.0
        %v985 = vand.u32 %v229, 4294901760
        %986 = vmatmul.mubr.f32.gmra.mrb[0].mxu0 %v985
        %v987 = vpop.f32.mrb[0].mxu0
        %v988 = vadd.f32 %v823, %v987
        %v989 = vpop.f32.mrb[0].mxu0
        %990 = vmatprep.mubr.f32.mxu0 0.0
        %v991 = vand.u32 %v232, 4294901760
        %992 = vmatmul.mubr.f32.gmra.mrb[0].mxu0 %v991
        %v993 = vpop.f32.mrb[0].mxu0
        %v994 = vadd.f32 %v831, %v993
        %v995 = vpop.f32.mrb[0].mxu0
        %996 = vmatprep.mubr.f32.mxu0 0.0
        %v997 = vand.u32 %v235, 4294901760
        %998 = vmatmul.mubr.f32.gmra.mrb[0].mxu0 %v997
        %v999 = vpop.f32.mrb[0].mxu0
        %v1000 = vadd.f32 %v839, %v999
        %v1001 = vpop.f32.mrb[0].mxu0
        %1002 = vmatprep.mubr.f32.mxu0 0.0
        %v1003 = vand.u32 %v238, 4294901760
        %1004 = vmatmul.mubr.f32.gmra.mrb[0].mxu0 %v1003
        %v1005 = vpop.f32.mrb[0].mxu0
        %v1006 = vadd.f32 %v847, %v1005
        %v1007 = vpop.f32.mrb[0].mxu0
        %1008 = vmatprep.mubr.f32.mxu0 0.0
        %v1009 = vand.u32 %v241, 4294901760
        %1010 = vmatmul.mubr.f32.gmra.mrb[0].mxu0 %v1009
        %v1011 = vpop.f32.mrb[0].mxu0
        %v1012 = vadd.f32 %v855, %v1011
        %v1013 = vpop.f32.mrb[0].mxu0
        %1014 = vmatprep.mubr.f32.mxu0 0.0
        %v1015 = vand.u32 %v244, 4294901760
        %1016 = vmatmul.mubr.f32.gmra.mrb[0].mxu0 %v1015
        %v1017 = vpop.f32.mrb[0].mxu0
        %v1018 = vadd.f32 %v863, %v1017
        %v1019 = vpop.f32.mrb[0].mxu0
        %1020 = vmatprep.mubr.f32.mxu0 0.0
        %v1021 = vand.u32 %v247, 4294901760
        %1022 = vmatmul.mubr.f32.gmra.mrb[0].mxu0 %v1021
        %v1023 = vpop.f32.mrb[0].mxu0
        %v1024 = vadd.f32 %v871, %v1023
        %v1025 = vpop.f32.mrb[0].mxu0
        %1026 = vmatprep.mubr.f32.mxu0 0.0
        %v1027 = vand.u32 %v250, 4294901760
        %1028 = vmatmul.mubr.f32.gmra.mrb[0].mxu0 %v1027
        %v1029 = vpop.f32.mrb[0].mxu0
        %v1030 = vadd.f32 %v879, %v1029
        %v1031 = vpop.f32.mrb[0].mxu0
        %1032 = vmatprep.mubr.f32.mxu0 0.0
        %v1033 = vand.u32 %v253, 4294901760
        %1034 = vmatmul.mubr.f32.gmra.mrb[0].mxu0 %v1033
        %v1035 = vpop.f32.mrb[0].mxu0
        %v1036 = vadd.f32 %v887, %v1035
        %v1037 = vpop.f32.mrb[0].mxu0
        %1038 = vmatprep.mubr.f32.mxu0 0.0
        %v1039 = vand.u32 %v256, 4294901760
        %1040 = vmatmul.mubr.f32.gmra.mrb[0].mxu0 %v1039
        %v1041 = vpop.f32.mrb[0].mxu0
        %v1042 = vadd.f32 %v895, %v1041
        %v1043 = vpop.f32.mrb[0].mxu0
        %1044 = vmatprep.mubr.f32.mxu0 0.0
        %v1045 = vand.u32 %v259, 4294901760
        %1046 = vmatmul.mubr.f32.gmra.mrb[0].mxu0 %v1045
        %v1047 = vpop.f32.mrb[0].mxu0
        %v1048 = vadd.f32 %v903, %v1047
        %v1049 = vpop.f32.mrb[0].mxu0
        %1050 = vmatprep.mubr.f32.mxu0 0.0
        %v1051 = vand.u32 %v262, 4294901760
        %1052 = vmatmul.mubr.f32.gmra.mrb[0].mxu0 %v1051
        %v1053 = vpop.f32.mrb[0].mxu0
        %v1054 = vadd.f32 %v911, %v1053
        %v1055 = vpop.f32.mrb[0].mxu0
        %1056 = vdwg.mxu0
        %1057 = vmatprep.subr.mxu0 0.0
        %v1058 = vand.u32 %v225, 4294901760
        %1059 = vmatpush1.msra.mxu0 %v1058
        %1060 = vmatprep.subr.mxu0 0.0
        %v1061 = vand.u32 %v226, 4294901760
        %1062 = vmatpush1.msra.mxu0 %v1061
        %1063 = vmatprep.subr.mxu0 0.0
        %1064 = vmatpush1.msra.mxu0 0.0
        %1065 = vmatprep.subr.mxu0 0.0
        %1066 = vmatpush1.msra.mxu0 0.0
        %1067 = vmatprep.subr.mxu0 0.0
        %1068 = vmatpush1.msra.mxu0 0.0
        %1069 = vmatprep.subr.mxu0 0.0
        %1070 = vmatpush1.msra.mxu0 0.0
        %1071 = vmatprep.subr.mxu0 0.0
        %1072 = vmatpush1.msra.mxu0 0.0
        %1073 = vmatprep.subr.mxu0 0.0
        %1074 = vmatpush1.msra.mxu0 0.0
        %1075 = vmatprep.subr.mxu0 0.0
        %1076 = vmatpush1.msra.mxu0 0.0
        %1077 = vmatprep.subr.mxu0 0.0
        %1078 = vmatpush1.msra.mxu0 0.0
        %1079 = vmatprep.subr.mxu0 0.0
        %1080 = vmatpush1.msra.mxu0 0.0
        %1081 = vmatprep.subr.mxu0 0.0
        %1082 = vmatpush1.msra.mxu0 0.0
        %1083 = vmatprep.subr.mxu0 0.0
        %1084 = vmatpush1.msra.mxu0 0.0
        %1085 = vmatprep.subr.mxu0 0.0
        %1086 = vmatpush1.msra.mxu0 0.0
        %1087 = vmatprep.subr.mxu0 0.0
        %1088 = vmatpush1.msra.mxu0 0.0
        %1089 = vmatprep.subr.mxu0 0.0
        %1090 = vmatpush1.msra.mxu0 0.0
        %1091 = vmatprep.subr.mxu0 0.0
        %1092 = vmatpush1.msra.mxu0 0.0
        %1093 = vmatprep.subr.mxu0 0.0
        %1094 = vmatpush1.msra.mxu0 0.0
        %1095 = vmatprep.subr.mxu0 0.0
        %1096 = vmatpush1.msra.mxu0 0.0
        %1097 = vmatprep.subr.mxu0 0.0
        %1098 = vmatpush1.msra.mxu0 0.0
        %1099 = vmatprep.subr.mxu0 0.0
        %1100 = vmatpush1.msra.mxu0 0.0
        %1101 = vmatprep.subr.mxu0 0.0
        %1102 = vmatpush1.msra.mxu0 0.0
        %1103 = vmatprep.subr.mxu0 0.0
        %1104 = vmatpush1.msra.mxu0 0.0
        %1105 = vmatprep.subr.mxu0 0.0
        %1106 = vmatpush1.msra.mxu0 0.0
        %1107 = vmatprep.subr.mxu0 0.0
        %1108 = vmatpush1.msra.mxu0 0.0
        %1109 = vmatprep.subr.mxu0 0.0
        %1110 = vmatpush1.msra.mxu0 0.0
        %1111 = vmatprep.subr.mxu0 0.0
        %1112 = vmatpush1.msra.mxu0 0.0
        %1113 = vmatprep.subr.mxu0 0.0
        %1114 = vmatpush1.msra.mxu0 0.0
        %1115 = vmatprep.subr.mxu0 0.0
        %1116 = vmatpush1.msra.mxu0 0.0
        %1117 = vmatprep.subr.mxu0 0.0
        %1118 = vmatpush1.msra.mxu0 0.0
        %1119 = vmatprep.subr.mxu0 0.0
        %1120 = vmatpush1.msra.mxu0 0.0
        %1121 = vmatprep.subr.mxu0 0.0
        %1122 = vmatpush1.msra.mxu0 0.0
        %1123 = vmatprep.mubr.f32.mxu0 0.0
        %v1124 = vand.u32 %v229, 4294901760
        %1125 = vmatmul.mubr.f32.gmra.mrb[0].mxu0 %v1124
        %v1126 = vpop.f32.mrb[0].mxu0
        %v1127 = vadd.f32 %v988, %v1126
        %v1128 = vpop.f32.mrb[0].mxu0
        %1129 = vmatprep.mubr.f32.mxu0 0.0
        %v1130 = vand.u32 %v232, 4294901760
        %1131 = vmatmul.mubr.f32.gmra.mrb[0].mxu0 %v1130
        %v1132 = vpop.f32.mrb[0].mxu0
        %v1133 = vadd.f32 %v994, %v1132
        %v1134 = vpop.f32.mrb[0].mxu0
        %1135 = vmatprep.mubr.f32.mxu0 0.0
        %v1136 = vand.u32 %v235, 4294901760
        %1137 = vmatmul.mubr.f32.gmra.mrb[0].mxu0 %v1136
        %v1138 = vpop.f32.mrb[0].mxu0
        %v1139 = vadd.f32 %v1000, %v1138
        %v1140 = vpop.f32.mrb[0].mxu0
        %1141 = vmatprep.mubr.f32.mxu0 0.0
        %v1142 = vand.u32 %v238, 4294901760
        %1143 = vmatmul.mubr.f32.gmra.mrb[0].mxu0 %v1142
        %v1144 = vpop.f32.mrb[0].mxu0
        %v1145 = vadd.f32 %v1006, %v1144
        %v1146 = vpop.f32.mrb[0].mxu0
        %1147 = vmatprep.mubr.f32.mxu0 0.0
        %v1148 = vand.u32 %v241, 4294901760
        %1149 = vmatmul.mubr.f32.gmra.mrb[0].mxu0 %v1148
        %v1150 = vpop.f32.mrb[0].mxu0
        %v1151 = vadd.f32 %v1012, %v1150
        %v1152 = vpop.f32.mrb[0].mxu0
        %1153 = vmatprep.mubr.f32.mxu0 0.0
        %v1154 = vand.u32 %v244, 4294901760
        %1155 = vmatmul.mubr.f32.gmra.mrb[0].mxu0 %v1154
        %v1156 = vpop.f32.mrb[0].mxu0
        %v1157 = vadd.f32 %v1018, %v1156
        %v1158 = vpop.f32.mrb[0].mxu0
        %1159 = vmatprep.mubr.f32.mxu0 0.0
        %v1160 = vand.u32 %v247, 4294901760
        %1161 = vmatmul.mubr.f32.gmra.mrb[0].mxu0 %v1160
        %v1162 = vpop.f32.mrb[0].mxu0
        %v1163 = vadd.f32 %v1024, %v1162
        %v1164 = vpop.f32.mrb[0].mxu0
        %1165 = vmatprep.mubr.f32.mxu0 0.0
        %v1166 = vand.u32 %v250, 4294901760
        %1167 = vmatmul.mubr.f32.gmra.mrb[0].mxu0 %v1166
        %v1168 = vpop.f32.mrb[0].mxu0
        %v1169 = vadd.f32 %v1030, %v1168
        %v1170 = vpop.f32.mrb[0].mxu0
        %1171 = vmatprep.mubr.f32.mxu0 0.0
        %v1172 = vand.u32 %v253, 4294901760
        %1173 = vmatmul.mubr.f32.gmra.mrb[0].mxu0 %v1172
        %v1174 = vpop.f32.mrb[0].mxu0
        %v1175 = vadd.f32 %v1036, %v1174
        %v1176 = vpop.f32.mrb[0].mxu0
        %1177 = vmatprep.mubr.f32.mxu0 0.0
        %v1178 = vand.u32 %v256, 4294901760
        %1179 = vmatmul.mubr.f32.gmra.mrb[0].mxu0 %v1178
        %v1180 = vpop.f32.mrb[0].mxu0
        %v1181 = vadd.f32 %v1042, %v1180
        %v1182 = vpop.f32.mrb[0].mxu0
        %1183 = vmatprep.mubr.f32.mxu0 0.0
        %v1184 = vand.u32 %v259, 4294901760
        %1185 = vmatmul.mubr.f32.gmra.mrb[0].mxu0 %v1184
        %v1186 = vpop.f32.mrb[0].mxu0
        %v1187 = vadd.f32 %v1048, %v1186
        %v1188 = vpop.f32.mrb[0].mxu0
        %1189 = vmatprep.mubr.f32.mxu0 0.0
        %v1190 = vand.u32 %v262, 4294901760
        %1191 = vmatmul.mubr.f32.gmra.mrb[0].mxu0 %v1190
        %v1192 = vpop.f32.mrb[0].mxu0
        %v1193 = vadd.f32 %v1054, %v1192
        %v1194 = vpop.f32.mrb[0].mxu0
        %1195 = vdwg.mxu0
        %vm1196 = vcmask 64512
        %1197 = vst.msk [vmem:[%s208] sm:$0xff] %vm1196, %v1127
        %1198 = vst.msk [vmem:[%s208 + $0x8] sm:$0xff] %vm1196, %v1133
        %1199 = vst.msk [vmem:[%s208 + $0x10] sm:$0xff] %vm1196, %v1139
        %1200 = vst.msk [vmem:[%s208 + $0x18] sm:$0xff] %vm1196, %v1145
        %1201 = vst.msk [vmem:[%s208 + $0x20] sm:$0xff] %vm1196, %v1151
        %1202 = vst.msk [vmem:[%s208 + $0x28] sm:$0xff] %vm1196, %v1157
        %1203 = vst.msk [vmem:[%s208 + $0x30] sm:$0xff] %vm1196, %v1163
        %1204 = vst.msk [vmem:[%s208 + $0x38] sm:$0xff] %vm1196, %v1169
        %1205 = vst.msk [vmem:[%s208 + $0x40] sm:$0xff] %vm1196, %v1175
        %1206 = vst.msk [vmem:[%s208 + $0x48] sm:$0xff] %vm1196, %v1181
        %1207 = vst.msk [vmem:[%s208 + $0x50] sm:$0xff] %vm1196, %v1187
        %1208 = vst.msk [vmem:[%s208 + $0x58] sm:$0xff] %vm1196, %v1193
        %1221 = vrot.lane.b32.xlu0 %v1127, 120
        %v1222 = vpop.permute.xlu0 %1221
        %1223 = vrot.lane.b32.xlu0 %v1133, 120
        %v1224 = vpop.permute.xlu0 %1223
        %1225 = vrot.lane.b32.xlu0 %v1139, 120
        %v1226 = vpop.permute.xlu0 %1225
        %1227 = vrot.lane.b32.xlu0 %v1145, 120
        %v1228 = vpop.permute.xlu0 %1227
        %1229 = vrot.lane.b32.xlu0 %v1151, 120
        %v1230 = vpop.permute.xlu0 %1229
        %1231 = vrot.lane.b32.xlu0 %v1157, 120
        %v1232 = vpop.permute.xlu0 %1231
        %1233 = vrot.lane.b32.xlu0 %v1163, 120
        %v1234 = vpop.permute.xlu0 %1233
        %1235 = vrot.lane.b32.xlu0 %v1169, 120
        %v1236 = vpop.permute.xlu0 %1235
        %1237 = vrot.lane.b32.xlu0 %v1175, 120
        %v1238 = vpop.permute.xlu0 %1237
        %1239 = vrot.lane.b32.xlu0 %v1181, 120
        %v1240 = vpop.permute.xlu0 %1239
        %1241 = vrot.lane.b32.xlu0 %v1187, 120
        %v1242 = vpop.permute.xlu0 %1241
        %1243 = vrot.lane.b32.xlu0 %v1193, 120
        %v1244 = vpop.permute.xlu0 %1243
        %s1257 = scalar_lea.vmem %s208, 96 [#allocation7]
        %1258 = vst.msk [vmem:[%s1257] sm:$0xff] %vm1196, %v1222
        %1259 = vst.msk [vmem:[%s1257 + $0x8] sm:$0xff] %vm1196, %v1224
        %1260 = vst.msk [vmem:[%s1257 + $0x10] sm:$0xff] %vm1196, %v1226
        %1261 = vst.msk [vmem:[%s1257 + $0x18] sm:$0xff] %vm1196, %v1228
        %1262 = vst.msk [vmem:[%s1257 + $0x20] sm:$0xff] %vm1196, %v1230
        %1263 = vst.msk [vmem:[%s1257 + $0x28] sm:$0xff] %vm1196, %v1232
        %1264 = vst.msk [vmem:[%s1257 + $0x30] sm:$0xff] %vm1196, %v1234
        %1265 = vst.msk [vmem:[%s1257 + $0x38] sm:$0xff] %vm1196, %v1236
        %1266 = vst.msk [vmem:[%s1257 + $0x40] sm:$0xff] %vm1196, %v1238
        %1267 = vst.msk [vmem:[%s1257 + $0x48] sm:$0xff] %vm1196, %v1240
        %1268 = vst.msk [vmem:[%s1257 + $0x50] sm:$0xff] %vm1196, %v1242
        %1269 = vst.msk [vmem:[%s1257 + $0x58] sm:$0xff] %vm1196, %v1244
        %v1270 = vld [vmem:[#allocation5] sm:$0xff]
        %v1271 = vld [vmem:[#allocation5 + $0x8] sm:$0xff]
        %1272 = vrot.lane.b32.xlu0 %v213, 112
        %v1273 = vpop.permute.xlu0 %1272
        %1274 = vrot.lane.b32.xlu0 %v214, 112
        %v1275 = vpop.permute.xlu0 %1274
        %1276 = vrot.lane.b32.xlu0 %v215, 112
        %v1277 = vpop.permute.xlu0 %1276
        %1278 = vrot.lane.b32.xlu0 %v216, 112
        %v1279 = vpop.permute.xlu0 %1278
        %1280 = vrot.lane.b32.xlu0 %v217, 112
        %v1281 = vpop.permute.xlu0 %1280
        %1282 = vrot.lane.b32.xlu0 %v218, 112
        %v1283 = vpop.permute.xlu0 %1282
        %1284 = vrot.lane.b32.xlu0 %v219, 112
        %v1285 = vpop.permute.xlu0 %1284
        %1286 = vrot.lane.b32.xlu0 %v220, 112
        %v1287 = vpop.permute.xlu0 %1286
        %1288 = vrot.lane.b32.xlu0 %v221, 112
        %v1289 = vpop.permute.xlu0 %1288
        %1290 = vrot.lane.b32.xlu0 %v222, 112
        %v1291 = vpop.permute.xlu0 %1290
        %1292 = vrot.lane.b32.xlu0 %v223, 112
        %v1293 = vpop.permute.xlu0 %1292
        %1294 = vrot.lane.b32.xlu0 %v224, 112
        %v1295 = vpop.permute.xlu0 %1294
        %v1296 = vsel %vm227, %v1273, 0
        %v1298 = vsel %vm227, %v1275, 0
        %v1300 = vsel %vm227, %v1277, 0
        %v1302 = vsel %vm227, %v1279, 0
        %v1304 = vsel %vm227, %v1281, 0
        %v1306 = vsel %vm227, %v1283, 0
        %v1308 = vsel %vm227, %v1285, 0
        %v1310 = vsel %vm227, %v1287, 0
        %v1312 = vsel %vm227, %v1289, 0
        %v1314 = vsel %vm227, %v1291, 0
        %v1316 = vsel %vm227, %v1293, 0
        %v1318 = vsel %vm227, %v1295, 0
        %1320 = vmatprep.subr.mxu0 0.0
        %v1321 = vand.u32 %v1270, 4294901760
        %1322 = vmatpush1.msra.mxu0 %v1321
        %1323 = vmatprep.subr.mxu0 0.0
        %v1324 = vand.u32 %v1271, 4294901760
        %1325 = vmatpush1.msra.mxu0 %v1324
        %1326 = vmatprep.subr.mxu0 0.0
        %1327 = vmatpush1.msra.mxu0 0.0
        %1328 = vmatprep.subr.mxu0 0.0
        %1329 = vmatpush1.msra.mxu0 0.0
        %1330 = vmatprep.subr.mxu0 0.0
        %1331 = vmatpush1.msra.mxu0 0.0
        %1332 = vmatprep.subr.mxu0 0.0
        %1333 = vmatpush1.msra.mxu0 0.0
        %1334 = vmatprep.subr.mxu0 0.0
        %1335 = vmatpush1.msra.mxu0 0.0
        %1336 = vmatprep.subr.mxu0 0.0
        %1337 = vmatpush1.msra.mxu0 0.0
        %1338 = vmatprep.subr.mxu0 0.0
        %1339 = vmatpush1.msra.mxu0 0.0
        %1340 = vmatprep.subr.mxu0 0.0
        %1341 = vmatpush1.msra.mxu0 0.0
        %1342 = vmatprep.subr.mxu0 0.0
        %1343 = vmatpush1.msra.mxu0 0.0
        %1344 = vmatprep.subr.mxu0 0.0
        %1345 = vmatpush1.msra.mxu0 0.0
        %1346 = vmatprep.subr.mxu0 0.0
        %1347 = vmatpush1.msra.mxu0 0.0
        %1348 = vmatprep.subr.mxu0 0.0
        %1349 = vmatpush1.msra.mxu0 0.0
        %1350 = vmatprep.subr.mxu0 0.0
        %1351 = vmatpush1.msra.mxu0 0.0
        %1352 = vmatprep.subr.mxu0 0.0
        %1353 = vmatpush1.msra.mxu0 0.0
        %1354 = vmatprep.subr.mxu0 0.0
        %1355 = vmatpush1.msra.mxu0 0.0
        %1356 = vmatprep.subr.mxu0 0.0
        %1357 = vmatpush1.msra.mxu0 0.0
        %1358 = vmatprep.subr.mxu0 0.0
        %1359 = vmatpush1.msra.mxu0 0.0
        %1360 = vmatprep.subr.mxu0 0.0
        %1361 = vmatpush1.msra.mxu0 0.0
        %1362 = vmatprep.subr.mxu0 0.0
        %1363 = vmatpush1.msra.mxu0 0.0
        %1364 = vmatprep.subr.mxu0 0.0
        %1365 = vmatpush1.msra.mxu0 0.0
        %1366 = vmatprep.subr.mxu0 0.0
        %1367 = vmatpush1.msra.mxu0 0.0
        %1368 = vmatprep.subr.mxu0 0.0
        %1369 = vmatpush1.msra.mxu0 0.0
        %1370 = vmatprep.subr.mxu0 0.0
        %1371 = vmatpush1.msra.mxu0 0.0
        %1372 = vmatprep.subr.mxu0 0.0
        %1373 = vmatpush1.msra.mxu0 0.0
        %1374 = vmatprep.subr.mxu0 0.0
        %1375 = vmatpush1.msra.mxu0 0.0
        %1376 = vmatprep.subr.mxu0 0.0
        %1377 = vmatpush1.msra.mxu0 0.0
        %1378 = vmatprep.subr.mxu0 0.0
        %1379 = vmatpush1.msra.mxu0 0.0
        %1380 = vmatprep.subr.mxu0 0.0
        %1381 = vmatpush1.msra.mxu0 0.0
        %1382 = vmatprep.subr.mxu0 0.0
        %1383 = vmatpush1.msra.mxu0 0.0
        %1384 = vmatprep.subr.mxu0 0.0
        %1385 = vmatpush1.msra.mxu0 0.0
        %1386 = vmatprep.mubr.f32.mxu0 0.0
        %v1387 = vand.u32 %v1296, 4294901760
        %v1388 = vsub.f32 %v1296, %v1387
        %v1389 = vand.u32 %v1388, 4294901760
        %v1390 = vsub.f32 %v1388, %v1389
        %v1391 = vand.u32 %v1390, 4294901760
        %1392 = vmatmul.mubr.f32.gmra.mrb[0].mxu0 %v1391
        %v1393 = vpop.f32.mrb[0].mxu0
        %v1394 = vadd.f32 0.0, %v1393
        %v1395 = vpop.f32.mrb[0].mxu0
        %1396 = vmatprep.mubr.f32.mxu0 0.0
        %v1397 = vand.u32 %v1298, 4294901760
        %v1398 = vsub.f32 %v1298, %v1397
        %v1399 = vand.u32 %v1398, 4294901760
        %v1400 = vsub.f32 %v1398, %v1399
        %v1401 = vand.u32 %v1400, 4294901760
        %1402 = vmatmul.mubr.f32.gmra.mrb[0].mxu0 %v1401
        %v1403 = vpop.f32.mrb[0].mxu0
        %v1404 = vadd.f32 0.0, %v1403
        %v1405 = vpop.f32.mrb[0].mxu0
        %1406 = vmatprep.mubr.f32.mxu0 0.0
        %v1407 = vand.u32 %v1300, 4294901760
        %v1408 = vsub.f32 %v1300, %v1407
        %v1409 = vand.u32 %v1408, 4294901760
        %v1410 = vsub.f32 %v1408, %v1409
        %v1411 = vand.u32 %v1410, 4294901760
        %1412 = vmatmul.mubr.f32.gmra.mrb[0].mxu0 %v1411
        %v1413 = vpop.f32.mrb[0].mxu0
        %v1414 = vadd.f32 0.0, %v1413
        %v1415 = vpop.f32.mrb[0].mxu0
        %1416 = vmatprep.mubr.f32.mxu0 0.0
        %v1417 = vand.u32 %v1302, 4294901760
        %v1418 = vsub.f32 %v1302, %v1417
        %v1419 = vand.u32 %v1418, 4294901760
        %v1420 = vsub.f32 %v1418, %v1419
        %v1421 = vand.u32 %v1420, 4294901760
        %1422 = vmatmul.mubr.f32.gmra.mrb[0].mxu0 %v1421
        %v1423 = vpop.f32.mrb[0].mxu0
        %v1424 = vadd.f32 0.0, %v1423
        %v1425 = vpop.f32.mrb[0].mxu0
        %1426 = vmatprep.mubr.f32.mxu0 0.0
        %v1427 = vand.u32 %v1304, 4294901760
        %v1428 = vsub.f32 %v1304, %v1427
        %v1429 = vand.u32 %v1428, 4294901760
        %v1430 = vsub.f32 %v1428, %v1429
        %v1431 = vand.u32 %v1430, 4294901760
        %1432 = vmatmul.mubr.f32.gmra.mrb[0].mxu0 %v1431
        %v1433 = vpop.f32.mrb[0].mxu0
        %v1434 = vadd.f32 0.0, %v1433
        %v1435 = vpop.f32.mrb[0].mxu0
        %1436 = vmatprep.mubr.f32.mxu0 0.0
        %v1437 = vand.u32 %v1306, 4294901760
        %v1438 = vsub.f32 %v1306, %v1437
        %v1439 = vand.u32 %v1438, 4294901760
        %v1440 = vsub.f32 %v1438, %v1439
        %v1441 = vand.u32 %v1440, 4294901760
        %1442 = vmatmul.mubr.f32.gmra.mrb[0].mxu0 %v1441
        %v1443 = vpop.f32.mrb[0].mxu0
        %v1444 = vadd.f32 0.0, %v1443
        %v1445 = vpop.f32.mrb[0].mxu0
        %1446 = vmatprep.mubr.f32.mxu0 0.0
        %v1447 = vand.u32 %v1308, 4294901760
        %v1448 = vsub.f32 %v1308, %v1447
        %v1449 = vand.u32 %v1448, 4294901760
        %v1450 = vsub.f32 %v1448, %v1449
        %v1451 = vand.u32 %v1450, 4294901760
        %1452 = vmatmul.mubr.f32.gmra.mrb[0].mxu0 %v1451
        %v1453 = vpop.f32.mrb[0].mxu0
        %v1454 = vadd.f32 0.0, %v1453
        %v1455 = vpop.f32.mrb[0].mxu0
        %1456 = vmatprep.mubr.f32.mxu0 0.0
        %v1457 = vand.u32 %v1310, 4294901760
        %v1458 = vsub.f32 %v1310, %v1457
        %v1459 = vand.u32 %v1458, 4294901760
        %v1460 = vsub.f32 %v1458, %v1459
        %v1461 = vand.u32 %v1460, 4294901760
        %1462 = vmatmul.mubr.f32.gmra.mrb[0].mxu0 %v1461
        %v1463 = vpop.f32.mrb[0].mxu0
        %v1464 = vadd.f32 0.0, %v1463
        %v1465 = vpop.f32.mrb[0].mxu0
        %1466 = vmatprep.mubr.f32.mxu0 0.0
        %v1467 = vand.u32 %v1312, 4294901760
        %v1468 = vsub.f32 %v1312, %v1467
        %v1469 = vand.u32 %v1468, 4294901760
        %v1470 = vsub.f32 %v1468, %v1469
        %v1471 = vand.u32 %v1470, 4294901760
        %1472 = vmatmul.mubr.f32.gmra.mrb[0].mxu0 %v1471
        %v1473 = vpop.f32.mrb[0].mxu0
        %v1474 = vadd.f32 0.0, %v1473
        %v1475 = vpop.f32.mrb[0].mxu0
        %1476 = vmatprep.mubr.f32.mxu0 0.0
        %v1477 = vand.u32 %v1314, 4294901760
        %v1478 = vsub.f32 %v1314, %v1477
        %v1479 = vand.u32 %v1478, 4294901760
        %v1480 = vsub.f32 %v1478, %v1479
        %v1481 = vand.u32 %v1480, 4294901760
        %1482 = vmatmul.mubr.f32.gmra.mrb[0].mxu0 %v1481
        %v1483 = vpop.f32.mrb[0].mxu0
        %v1484 = vadd.f32 0.0, %v1483
        %v1485 = vpop.f32.mrb[0].mxu0
        %1486 = vmatprep.mubr.f32.mxu0 0.0
        %v1487 = vand.u32 %v1316, 4294901760
        %v1488 = vsub.f32 %v1316, %v1487
        %v1489 = vand.u32 %v1488, 4294901760
        %v1490 = vsub.f32 %v1488, %v1489
        %v1491 = vand.u32 %v1490, 4294901760
        %1492 = vmatmul.mubr.f32.gmra.mrb[0].mxu0 %v1491
        %v1493 = vpop.f32.mrb[0].mxu0
        %v1494 = vadd.f32 0.0, %v1493
        %v1495 = vpop.f32.mrb[0].mxu0
        %1496 = vmatprep.mubr.f32.mxu0 0.0
        %v1497 = vand.u32 %v1318, 4294901760
        %v1498 = vsub.f32 %v1318, %v1497
        %v1499 = vand.u32 %v1498, 4294901760
        %v1500 = vsub.f32 %v1498, %v1499
        %v1501 = vand.u32 %v1500, 4294901760
        %1502 = vmatmul.mubr.f32.gmra.mrb[0].mxu0 %v1501
        %v1503 = vpop.f32.mrb[0].mxu0
        %v1504 = vadd.f32 0.0, %v1503
        %v1505 = vpop.f32.mrb[0].mxu0
        %1506 = vdwg.mxu0
        %1507 = vmatprep.subr.mxu0 0.0
        %v1508 = vand.u32 %v1270, 4294901760
        %v1509 = vsub.f32 %v1270, %v1508
        %v1510 = vand.u32 %v1509, 4294901760
        %v1511 = vsub.f32 %v1509, %v1510
        %v1512 = vand.u32 %v1511, 4294901760
        %1513 = vmatpush1.msra.mxu0 %v1512
        %1514 = vmatprep.subr.mxu0 0.0
        %v1515 = vand.u32 %v1271, 4294901760
        %v1516 = vsub.f32 %v1271, %v1515
        %v1517 = vand.u32 %v1516, 4294901760
        %v1518 = vsub.f32 %v1516, %v1517
        %v1519 = vand.u32 %v1518, 4294901760
        %1520 = vmatpush1.msra.mxu0 %v1519
        %1521 = vmatprep.subr.mxu0 0.0
        %1522 = vmatpush1.msra.mxu0 0.0
        %1523 = vmatprep.subr.mxu0 0.0
        %1524 = vmatpush1.msra.mxu0 0.0
        %1525 = vmatprep.subr.mxu0 0.0
        %1526 = vmatpush1.msra.mxu0 0.0
        %1527 = vmatprep.subr.mxu0 0.0
        %1528 = vmatpush1.msra.mxu0 0.0
        %1529 = vmatprep.subr.mxu0 0.0
        %1530 = vmatpush1.msra.mxu0 0.0
        %1531 = vmatprep.subr.mxu0 0.0
        %1532 = vmatpush1.msra.mxu0 0.0
        %1533 = vmatprep.subr.mxu0 0.0
        %1534 = vmatpush1.msra.mxu0 0.0
        %1535 = vmatprep.subr.mxu0 0.0
        %1536 = vmatpush1.msra.mxu0 0.0
        %1537 = vmatprep.subr.mxu0 0.0
        %1538 = vmatpush1.msra.mxu0 0.0
        %1539 = vmatprep.subr.mxu0 0.0
        %1540 = vmatpush1.msra.mxu0 0.0
        %1541 = vmatprep.subr.mxu0 0.0
        %1542 = vmatpush1.msra.mxu0 0.0
        %1543 = vmatprep.subr.mxu0 0.0
        %1544 = vmatpush1.msra.mxu0 0.0
        %1545 = vmatprep.subr.mxu0 0.0
        %1546 = vmatpush1.msra.mxu0 0.0
        %1547 = vmatprep.subr.mxu0 0.0
        %1548 = vmatpush1.msra.mxu0 0.0
        %1549 = vmatprep.subr.mxu0 0.0
        %1550 = vmatpush1.msra.mxu0 0.0
        %1551 = vmatprep.subr.mxu0 0.0
        %1552 = vmatpush1.msra.mxu0 0.0
        %1553 = vmatprep.subr.mxu0 0.0
        %1554 = vmatpush1.msra.mxu0 0.0
        %1555 = vmatprep.subr.mxu0 0.0
        %1556 = vmatpush1.msra.mxu0 0.0
        %1557 = vmatprep.subr.mxu0 0.0
        %1558 = vmatpush1.msra.mxu0 0.0
        %1559 = vmatprep.subr.mxu0 0.0
        %1560 = vmatpush1.msra.mxu0 0.0
        %1561 = vmatprep.subr.mxu0 0.0
        %1562 = vmatpush1.msra.mxu0 0.0
        %1563 = vmatprep.subr.mxu0 0.0
        %1564 = vmatpush1.msra.mxu0 0.0
        %1565 = vmatprep.subr.mxu0 0.0
        %1566 = vmatpush1.msra.mxu0 0.0
        %1567 = vmatprep.subr.mxu0 0.0
        %1568 = vmatpush1.msra.mxu0 0.0
        %1569 = vmatprep.subr.mxu0 0.0
        %1570 = vmatpush1.msra.mxu0 0.0
        %1571 = vmatprep.subr.mxu0 0.0
        %1572 = vmatpush1.msra.mxu0 0.0
        %1573 = vmatprep.subr.mxu0 0.0
        %1574 = vmatpush1.msra.mxu0 0.0
        %1575 = vmatprep.subr.mxu0 0.0
        %1576 = vmatpush1.msra.mxu0 0.0
        %1577 = vmatprep.subr.mxu0 0.0
        %1578 = vmatpush1.msra.mxu0 0.0
        %1579 = vmatprep.subr.mxu0 0.0
        %1580 = vmatpush1.msra.mxu0 0.0
        %1581 = vmatprep.mubr.f32.mxu0 0.0
        %v1582 = vand.u32 %v1296, 4294901760
        %1583 = vmatmul.mubr.f32.gmra.mrb[0].mxu0 %v1582
        %v1584 = vpop.f32.mrb[0].mxu0
        %v1585 = vadd.f32 %v1394, %v1584
        %v1586 = vpop.f32.mrb[0].mxu0
        %1587 = vmatprep.mubr.f32.mxu0 0.0
        %v1588 = vand.u32 %v1298, 4294901760
        %1589 = vmatmul.mubr.f32.gmra.mrb[0].mxu0 %v1588
        %v1590 = vpop.f32.mrb[0].mxu0
        %v1591 = vadd.f32 %v1404, %v1590
        %v1592 = vpop.f32.mrb[0].mxu0
        %1593 = vmatprep.mubr.f32.mxu0 0.0
        %v1594 = vand.u32 %v1300, 4294901760
        %1595 = vmatmul.mubr.f32.gmra.mrb[0].mxu0 %v1594
        %v1596 = vpop.f32.mrb[0].mxu0
        %v1597 = vadd.f32 %v1414, %v1596
        %v1598 = vpop.f32.mrb[0].mxu0
        %1599 = vmatprep.mubr.f32.mxu0 0.0
        %v1600 = vand.u32 %v1302, 4294901760
        %1601 = vmatmul.mubr.f32.gmra.mrb[0].mxu0 %v1600
        %v1602 = vpop.f32.mrb[0].mxu0
        %v1603 = vadd.f32 %v1424, %v1602
        %v1604 = vpop.f32.mrb[0].mxu0
        %1605 = vmatprep.mubr.f32.mxu0 0.0
        %v1606 = vand.u32 %v1304, 4294901760
        %1607 = vmatmul.mubr.f32.gmra.mrb[0].mxu0 %v1606
        %v1608 = vpop.f32.mrb[0].mxu0
        %v1609 = vadd.f32 %v1434, %v1608
        %v1610 = vpop.f32.mrb[0].mxu0
        %1611 = vmatprep.mubr.f32.mxu0 0.0
        %v1612 = vand.u32 %v1306, 4294901760
        %1613 = vmatmul.mubr.f32.gmra.mrb[0].mxu0 %v1612
        %v1614 = vpop.f32.mrb[0].mxu0
        %v1615 = vadd.f32 %v1444, %v1614
        %v1616 = vpop.f32.mrb[0].mxu0
        %1617 = vmatprep.mubr.f32.mxu0 0.0
        %v1618 = vand.u32 %v1308, 4294901760
        %1619 = vmatmul.mubr.f32.gmra.mrb[0].mxu0 %v1618
        %v1620 = vpop.f32.mrb[0].mxu0
        %v1621 = vadd.f32 %v1454, %v1620
        %v1622 = vpop.f32.mrb[0].mxu0
        %1623 = vmatprep.mubr.f32.mxu0 0.0
        %v1624 = vand.u32 %v1310, 4294901760
        %1625 = vmatmul.mubr.f32.gmra.mrb[0].mxu0 %v1624
        %v1626 = vpop.f32.mrb[0].mxu0
        %v1627 = vadd.f32 %v1464, %v1626
        %v1628 = vpop.f32.mrb[0].mxu0
        %1629 = vmatprep.mubr.f32.mxu0 0.0
        %v1630 = vand.u32 %v1312, 4294901760
        %1631 = vmatmul.mubr.f32.gmra.mrb[0].mxu0 %v1630
        %v1632 = vpop.f32.mrb[0].mxu0
        %v1633 = vadd.f32 %v1474, %v1632
        %v1634 = vpop.f32.mrb[0].mxu0
        %1635 = vmatprep.mubr.f32.mxu0 0.0
        %v1636 = vand.u32 %v1314, 4294901760
        %1637 = vmatmul.mubr.f32.gmra.mrb[0].mxu0 %v1636
        %v1638 = vpop.f32.mrb[0].mxu0
        %v1639 = vadd.f32 %v1484, %v1638
        %v1640 = vpop.f32.mrb[0].mxu0
        %1641 = vmatprep.mubr.f32.mxu0 0.0
        %v1642 = vand.u32 %v1316, 4294901760
        %1643 = vmatmul.mubr.f32.gmra.mrb[0].mxu0 %v1642
        %v1644 = vpop.f32.mrb[0].mxu0
        %v1645 = vadd.f32 %v1494, %v1644
        %v1646 = vpop.f32.mrb[0].mxu0
        %1647 = vmatprep.mubr.f32.mxu0 0.0
        %v1648 = vand.u32 %v1318, 4294901760
        %1649 = vmatmul.mubr.f32.gmra.mrb[0].mxu0 %v1648
        %v1650 = vpop.f32.mrb[0].mxu0
        %v1651 = vadd.f32 %v1504, %v1650
        %v1652 = vpop.f32.mrb[0].mxu0
        %1653 = vdwg.mxu0
        %1654 = vmatprep.subr.mxu0 0.0
        %v1655 = vand.u32 %v1270, 4294901760
        %v1656 = vsub.f32 %v1270, %v1655
        %1657 = vmatpush1.msra.mxu0 %v1656
        %1658 = vmatprep.subr.mxu0 0.0
        %v1659 = vand.u32 %v1271, 4294901760
        %v1660 = vsub.f32 %v1271, %v1659
        %1661 = vmatpush1.msra.mxu0 %v1660
        %1662 = vmatprep.subr.mxu0 0.0
        %1663 = vmatpush1.msra.mxu0 0.0
        %1664 = vmatprep.subr.mxu0 0.0
        %1665 = vmatpush1.msra.mxu0 0.0
        %1666 = vmatprep.subr.mxu0 0.0
        %1667 = vmatpush1.msra.mxu0 0.0
        %1668 = vmatprep.subr.mxu0 0.0
        %1669 = vmatpush1.msra.mxu0 0.0
        %1670 = vmatprep.subr.mxu0 0.0
        %1671 = vmatpush1.msra.mxu0 0.0
        %1672 = vmatprep.subr.mxu0 0.0
        %1673 = vmatpush1.msra.mxu0 0.0
        %1674 = vmatprep.subr.mxu0 0.0
        %1675 = vmatpush1.msra.mxu0 0.0
        %1676 = vmatprep.subr.mxu0 0.0
        %1677 = vmatpush1.msra.mxu0 0.0
        %1678 = vmatprep.subr.mxu0 0.0
        %1679 = vmatpush1.msra.mxu0 0.0
        %1680 = vmatprep.subr.mxu0 0.0
        %1681 = vmatpush1.msra.mxu0 0.0
        %1682 = vmatprep.subr.mxu0 0.0
        %1683 = vmatpush1.msra.mxu0 0.0
        %1684 = vmatprep.subr.mxu0 0.0
        %1685 = vmatpush1.msra.mxu0 0.0
        %1686 = vmatprep.subr.mxu0 0.0
        %1687 = vmatpush1.msra.mxu0 0.0
        %1688 = vmatprep.subr.mxu0 0.0
        %1689 = vmatpush1.msra.mxu0 0.0
        %1690 = vmatprep.subr.mxu0 0.0
        %1691 = vmatpush1.msra.mxu0 0.0
        %1692 = vmatprep.subr.mxu0 0.0
        %1693 = vmatpush1.msra.mxu0 0.0
        %1694 = vmatprep.subr.mxu0 0.0
        %1695 = vmatpush1.msra.mxu0 0.0
        %1696 = vmatprep.subr.mxu0 0.0
        %1697 = vmatpush1.msra.mxu0 0.0
        %1698 = vmatprep.subr.mxu0 0.0
        %1699 = vmatpush1.msra.mxu0 0.0
        %1700 = vmatprep.subr.mxu0 0.0
        %1701 = vmatpush1.msra.mxu0 0.0
        %1702 = vmatprep.subr.mxu0 0.0
        %1703 = vmatpush1.msra.mxu0 0.0
        %1704 = vmatprep.subr.mxu0 0.0
        %1705 = vmatpush1.msra.mxu0 0.0
        %1706 = vmatprep.subr.mxu0 0.0
        %1707 = vmatpush1.msra.mxu0 0.0
        %1708 = vmatprep.subr.mxu0 0.0
        %1709 = vmatpush1.msra.mxu0 0.0
        %1710 = vmatprep.subr.mxu0 0.0
        %1711 = vmatpush1.msra.mxu0 0.0
        %1712 = vmatprep.subr.mxu0 0.0
        %1713 = vmatpush1.msra.mxu0 0.0
        %1714 = vmatprep.subr.mxu0 0.0
        %1715 = vmatpush1.msra.mxu0 0.0
        %1716 = vmatprep.subr.mxu0 0.0
        %1717 = vmatpush1.msra.mxu0 0.0
        %1718 = vmatprep.subr.mxu0 0.0
        %1719 = vmatpush1.msra.mxu0 0.0
        %1720 = vmatprep.subr.mxu0 0.0
        %1721 = vmatpush1.msra.mxu0 0.0
        %1722 = vmatprep.mubr.f32.mxu0 0.0
        %v1723 = vand.u32 %v1296, 4294901760
        %v1724 = vsub.f32 %v1296, %v1723
        %1725 = vmatmul.mubr.f32.gmra.mrb[0].mxu0 %v1724
        %v1726 = vpop.f32.mrb[0].mxu0
        %v1727 = vadd.f32 %v1585, %v1726
        %v1728 = vpop.f32.mrb[0].mxu0
        %1729 = vmatprep.mubr.f32.mxu0 0.0
        %v1730 = vand.u32 %v1298, 4294901760
        %v1731 = vsub.f32 %v1298, %v1730
        %1732 = vmatmul.mubr.f32.gmra.mrb[0].mxu0 %v1731
        %v1733 = vpop.f32.mrb[0].mxu0
        %v1734 = vadd.f32 %v1591, %v1733
        %v1735 = vpop.f32.mrb[0].mxu0
        %1736 = vmatprep.mubr.f32.mxu0 0.0
        %v1737 = vand.u32 %v1300, 4294901760
        %v1738 = vsub.f32 %v1300, %v1737
        %1739 = vmatmul.mubr.f32.gmra.mrb[0].mxu0 %v1738
        %v1740 = vpop.f32.mrb[0].mxu0
        %v1741 = vadd.f32 %v1597, %v1740
        %v1742 = vpop.f32.mrb[0].mxu0
        %1743 = vmatprep.mubr.f32.mxu0 0.0
        %v1744 = vand.u32 %v1302, 4294901760
        %v1745 = vsub.f32 %v1302, %v1744
        %1746 = vmatmul.mubr.f32.gmra.mrb[0].mxu0 %v1745
        %v1747 = vpop.f32.mrb[0].mxu0
        %v1748 = vadd.f32 %v1603, %v1747
        %v1749 = vpop.f32.mrb[0].mxu0
        %1750 = vmatprep.mubr.f32.mxu0 0.0
        %v1751 = vand.u32 %v1304, 4294901760
        %v1752 = vsub.f32 %v1304, %v1751
        %1753 = vmatmul.mubr.f32.gmra.mrb[0].mxu0 %v1752
        %v1754 = vpop.f32.mrb[0].mxu0
        %v1755 = vadd.f32 %v1609, %v1754
        %v1756 = vpop.f32.mrb[0].mxu0
        %1757 = vmatprep.mubr.f32.mxu0 0.0
        %v1758 = vand.u32 %v1306, 4294901760
        %v1759 = vsub.f32 %v1306, %v1758
        %1760 = vmatmul.mubr.f32.gmra.mrb[0].mxu0 %v1759
        %v1761 = vpop.f32.mrb[0].mxu0
        %v1762 = vadd.f32 %v1615, %v1761
        %v1763 = vpop.f32.mrb[0].mxu0
        %1764 = vmatprep.mubr.f32.mxu0 0.0
        %v1765 = vand.u32 %v1308, 4294901760
        %v1766 = vsub.f32 %v1308, %v1765
        %1767 = vmatmul.mubr.f32.gmra.mrb[0].mxu0 %v1766
        %v1768 = vpop.f32.mrb[0].mxu0
        %v1769 = vadd.f32 %v1621, %v1768
        %v1770 = vpop.f32.mrb[0].mxu0
        %1771 = vmatprep.mubr.f32.mxu0 0.0
        %v1772 = vand.u32 %v1310, 4294901760
        %v1773 = vsub.f32 %v1310, %v1772
        %1774 = vmatmul.mubr.f32.gmra.mrb[0].mxu0 %v1773
        %v1775 = vpop.f32.mrb[0].mxu0
        %v1776 = vadd.f32 %v1627, %v1775
        %v1777 = vpop.f32.mrb[0].mxu0
        %1778 = vmatprep.mubr.f32.mxu0 0.0
        %v1779 = vand.u32 %v1312, 4294901760
        %v1780 = vsub.f32 %v1312, %v1779
        %1781 = vmatmul.mubr.f32.gmra.mrb[0].mxu0 %v1780
        %v1782 = vpop.f32.mrb[0].mxu0
        %v1783 = vadd.f32 %v1633, %v1782
        %v1784 = vpop.f32.mrb[0].mxu0
        %1785 = vmatprep.mubr.f32.mxu0 0.0
        %v1786 = vand.u32 %v1314, 4294901760
        %v1787 = vsub.f32 %v1314, %v1786
        %1788 = vmatmul.mubr.f32.gmra.mrb[0].mxu0 %v1787
        %v1789 = vpop.f32.mrb[0].mxu0
        %v1790 = vadd.f32 %v1639, %v1789
        %v1791 = vpop.f32.mrb[0].mxu0
        %1792 = vmatprep.mubr.f32.mxu0 0.0
        %v1793 = vand.u32 %v1316, 4294901760
        %v1794 = vsub.f32 %v1316, %v1793
        %1795 = vmatmul.mubr.f32.gmra.mrb[0].mxu0 %v1794
        %v1796 = vpop.f32.mrb[0].mxu0
        %v1797 = vadd.f32 %v1645, %v1796
        %v1798 = vpop.f32.mrb[0].mxu0
        %1799 = vmatprep.mubr.f32.mxu0 0.0
        %v1800 = vand.u32 %v1318, 4294901760
        %v1801 = vsub.f32 %v1318, %v1800
        %1802 = vmatmul.mubr.f32.gmra.mrb[0].mxu0 %v1801
        %v1803 = vpop.f32.mrb[0].mxu0
        %v1804 = vadd.f32 %v1651, %v1803
        %v1805 = vpop.f32.mrb[0].mxu0
        %1806 = vdwg.mxu0
        %1807 = vmatprep.subr.mxu0 0.0
        %v1808 = vand.u32 %v1270, 4294901760
        %1809 = vmatpush1.msra.mxu0 %v1808
        %1810 = vmatprep.subr.mxu0 0.0
        %v1811 = vand.u32 %v1271, 4294901760
        %1812 = vmatpush1.msra.mxu0 %v1811
        %1813 = vmatprep.subr.mxu0 0.0
        %1814 = vmatpush1.msra.mxu0 0.0
        %1815 = vmatprep.subr.mxu0 0.0
        %1816 = vmatpush1.msra.mxu0 0.0
        %1817 = vmatprep.subr.mxu0 0.0
        %1818 = vmatpush1.msra.mxu0 0.0
        %1819 = vmatprep.subr.mxu0 0.0
        %1820 = vmatpush1.msra.mxu0 0.0
        %1821 = vmatprep.subr.mxu0 0.0
        %1822 = vmatpush1.msra.mxu0 0.0
        %1823 = vmatprep.subr.mxu0 0.0
        %1824 = vmatpush1.msra.mxu0 0.0
        %1825 = vmatprep.subr.mxu0 0.0
        %1826 = vmatpush1.msra.mxu0 0.0
        %1827 = vmatprep.subr.mxu0 0.0
        %1828 = vmatpush1.msra.mxu0 0.0
        %1829 = vmatprep.subr.mxu0 0.0
        %1830 = vmatpush1.msra.mxu0 0.0
        %1831 = vmatprep.subr.mxu0 0.0
        %1832 = vmatpush1.msra.mxu0 0.0
        %1833 = vmatprep.subr.mxu0 0.0
        %1834 = vmatpush1.msra.mxu0 0.0
        %1835 = vmatprep.subr.mxu0 0.0
        %1836 = vmatpush1.msra.mxu0 0.0
        %1837 = vmatprep.subr.mxu0 0.0
        %1838 = vmatpush1.msra.mxu0 0.0
        %1839 = vmatprep.subr.mxu0 0.0
        %1840 = vmatpush1.msra.mxu0 0.0
        %1841 = vmatprep.subr.mxu0 0.0
        %1842 = vmatpush1.msra.mxu0 0.0
        %1843 = vmatprep.subr.mxu0 0.0
        %1844 = vmatpush1.msra.mxu0 0.0
        %1845 = vmatprep.subr.mxu0 0.0
        %1846 = vmatpush1.msra.mxu0 0.0
        %1847 = vmatprep.subr.mxu0 0.0
        %1848 = vmatpush1.msra.mxu0 0.0
        %1849 = vmatprep.subr.mxu0 0.0
        %1850 = vmatpush1.msra.mxu0 0.0
        %1851 = vmatprep.subr.mxu0 0.0
        %1852 = vmatpush1.msra.mxu0 0.0
        %1853 = vmatprep.subr.mxu0 0.0
        %1854 = vmatpush1.msra.mxu0 0.0
        %1855 = vmatprep.subr.mxu0 0.0
        %1856 = vmatpush1.msra.mxu0 0.0
        %1857 = vmatprep.subr.mxu0 0.0
        %1858 = vmatpush1.msra.mxu0 0.0
        %1859 = vmatprep.subr.mxu0 0.0
        %1860 = vmatpush1.msra.mxu0 0.0
        %1861 = vmatprep.subr.mxu0 0.0
        %1862 = vmatpush1.msra.mxu0 0.0
        %1863 = vmatprep.subr.mxu0 0.0
        %1864 = vmatpush1.msra.mxu0 0.0
        %1865 = vmatprep.subr.mxu0 0.0
        %1866 = vmatpush1.msra.mxu0 0.0
        %1867 = vmatprep.subr.mxu0 0.0
        %1868 = vmatpush1.msra.mxu0 0.0
        %1869 = vmatprep.subr.mxu0 0.0
        %1870 = vmatpush1.msra.mxu0 0.0
        %1871 = vmatprep.subr.mxu0 0.0
        %1872 = vmatpush1.msra.mxu0 0.0
        %1873 = vmatprep.mubr.f32.mxu0 0.0
        %v1874 = vand.u32 %v1296, 4294901760
        %v1875 = vsub.f32 %v1296, %v1874
        %v1876 = vand.u32 %v1875, 4294901760
        %1877 = vmatmul.mubr.f32.gmra.mrb[0].mxu0 %v1876
        %v1878 = vpop.f32.mrb[0].mxu0
        %v1879 = vadd.f32 %v1727, %v1878
        %v1880 = vpop.f32.mrb[0].mxu0
        %1881 = vmatprep.mubr.f32.mxu0 0.0
        %v1882 = vand.u32 %v1298, 4294901760
        %v1883 = vsub.f32 %v1298, %v1882
        %v1884 = vand.u32 %v1883, 4294901760
        %1885 = vmatmul.mubr.f32.gmra.mrb[0].mxu0 %v1884
        %v1886 = vpop.f32.mrb[0].mxu0
        %v1887 = vadd.f32 %v1734, %v1886
        %v1888 = vpop.f32.mrb[0].mxu0
        %1889 = vmatprep.mubr.f32.mxu0 0.0
        %v1890 = vand.u32 %v1300, 4294901760
        %v1891 = vsub.f32 %v1300, %v1890
        %v1892 = vand.u32 %v1891, 4294901760
        %1893 = vmatmul.mubr.f32.gmra.mrb[0].mxu0 %v1892
        %v1894 = vpop.f32.mrb[0].mxu0
        %v1895 = vadd.f32 %v1741, %v1894
        %v1896 = vpop.f32.mrb[0].mxu0
        %1897 = vmatprep.mubr.f32.mxu0 0.0
        %v1898 = vand.u32 %v1302, 4294901760
        %v1899 = vsub.f32 %v1302, %v1898
        %v1900 = vand.u32 %v1899, 4294901760
        %1901 = vmatmul.mubr.f32.gmra.mrb[0].mxu0 %v1900
        %v1902 = vpop.f32.mrb[0].mxu0
        %v1903 = vadd.f32 %v1748, %v1902
        %v1904 = vpop.f32.mrb[0].mxu0
        %1905 = vmatprep.mubr.f32.mxu0 0.0
        %v1906 = vand.u32 %v1304, 4294901760
        %v1907 = vsub.f32 %v1304, %v1906
        %v1908 = vand.u32 %v1907, 4294901760
        %1909 = vmatmul.mubr.f32.gmra.mrb[0].mxu0 %v1908
        %v1910 = vpop.f32.mrb[0].mxu0
        %v1911 = vadd.f32 %v1755, %v1910
        %v1912 = vpop.f32.mrb[0].mxu0
        %1913 = vmatprep.mubr.f32.mxu0 0.0
        %v1914 = vand.u32 %v1306, 4294901760
        %v1915 = vsub.f32 %v1306, %v1914
        %v1916 = vand.u32 %v1915, 4294901760
        %1917 = vmatmul.mubr.f32.gmra.mrb[0].mxu0 %v1916
        %v1918 = vpop.f32.mrb[0].mxu0
        %v1919 = vadd.f32 %v1762, %v1918
        %v1920 = vpop.f32.mrb[0].mxu0
        %1921 = vmatprep.mubr.f32.mxu0 0.0
        %v1922 = vand.u32 %v1308, 4294901760
        %v1923 = vsub.f32 %v1308, %v1922
        %v1924 = vand.u32 %v1923, 4294901760
        %1925 = vmatmul.mubr.f32.gmra.mrb[0].mxu0 %v1924
        %v1926 = vpop.f32.mrb[0].mxu0
        %v1927 = vadd.f32 %v1769, %v1926
        %v1928 = vpop.f32.mrb[0].mxu0
        %1929 = vmatprep.mubr.f32.mxu0 0.0
        %v1930 = vand.u32 %v1310, 4294901760
        %v1931 = vsub.f32 %v1310, %v1930
        %v1932 = vand.u32 %v1931, 4294901760
        %1933 = vmatmul.mubr.f32.gmra.mrb[0].mxu0 %v1932
        %v1934 = vpop.f32.mrb[0].mxu0
        %v1935 = vadd.f32 %v1776, %v1934
        %v1936 = vpop.f32.mrb[0].mxu0
        %1937 = vmatprep.mubr.f32.mxu0 0.0
        %v1938 = vand.u32 %v1312, 4294901760
        %v1939 = vsub.f32 %v1312, %v1938
        %v1940 = vand.u32 %v1939, 4294901760
        %1941 = vmatmul.mubr.f32.gmra.mrb[0].mxu0 %v1940
        %v1942 = vpop.f32.mrb[0].mxu0
        %v1943 = vadd.f32 %v1783, %v1942
        %v1944 = vpop.f32.mrb[0].mxu0
        %1945 = vmatprep.mubr.f32.mxu0 0.0
        %v1946 = vand.u32 %v1314, 4294901760
        %v1947 = vsub.f32 %v1314, %v1946
        %v1948 = vand.u32 %v1947, 4294901760
        %1949 = vmatmul.mubr.f32.gmra.mrb[0].mxu0 %v1948
        %v1950 = vpop.f32.mrb[0].mxu0
        %v1951 = vadd.f32 %v1790, %v1950
        %v1952 = vpop.f32.mrb[0].mxu0
        %1953 = vmatprep.mubr.f32.mxu0 0.0
        %v1954 = vand.u32 %v1316, 4294901760
        %v1955 = vsub.f32 %v1316, %v1954
        %v1956 = vand.u32 %v1955, 4294901760
        %1957 = vmatmul.mubr.f32.gmra.mrb[0].mxu0 %v1956
        %v1958 = vpop.f32.mrb[0].mxu0
        %v1959 = vadd.f32 %v1797, %v1958
        %v1960 = vpop.f32.mrb[0].mxu0
        %1961 = vmatprep.mubr.f32.mxu0 0.0
        %v1962 = vand.u32 %v1318, 4294901760
        %v1963 = vsub.f32 %v1318, %v1962
        %v1964 = vand.u32 %v1963, 4294901760
        %1965 = vmatmul.mubr.f32.gmra.mrb[0].mxu0 %v1964
        %v1966 = vpop.f32.mrb[0].mxu0
        %v1967 = vadd.f32 %v1804, %v1966
        %v1968 = vpop.f32.mrb[0].mxu0
        %1969 = vdwg.mxu0
        %1970 = vmatprep.subr.mxu0 0.0
        %v1971 = vand.u32 %v1270, 4294901760
        %v1972 = vsub.f32 %v1270, %v1971
        %v1973 = vand.u32 %v1972, 4294901760
        %1974 = vmatpush1.msra.mxu0 %v1973
        %1975 = vmatprep.subr.mxu0 0.0
        %v1976 = vand.u32 %v1271, 4294901760
        %v1977 = vsub.f32 %v1271, %v1976
        %v1978 = vand.u32 %v1977, 4294901760
        %1979 = vmatpush1.msra.mxu0 %v1978
        %1980 = vmatprep.subr.mxu0 0.0
        %1981 = vmatpush1.msra.mxu0 0.0
        %1982 = vmatprep.subr.mxu0 0.0
        %1983 = vmatpush1.msra.mxu0 0.0
        %1984 = vmatprep.subr.mxu0 0.0
        %1985 = vmatpush1.msra.mxu0 0.0
        %1986 = vmatprep.subr.mxu0 0.0
        %1987 = vmatpush1.msra.mxu0 0.0
        %1988 = vmatprep.subr.mxu0 0.0
        %1989 = vmatpush1.msra.mxu0 0.0
        %1990 = vmatprep.subr.mxu0 0.0
        %1991 = vmatpush1.msra.mxu0 0.0
        %1992 = vmatprep.subr.mxu0 0.0
        %1993 = vmatpush1.msra.mxu0 0.0
        %1994 = vmatprep.subr.mxu0 0.0
        %1995 = vmatpush1.msra.mxu0 0.0
        %1996 = vmatprep.subr.mxu0 0.0
        %1997 = vmatpush1.msra.mxu0 0.0
        %1998 = vmatprep.subr.mxu0 0.0
        %1999 = vmatpush1.msra.mxu0 0.0
        %2000 = vmatprep.subr.mxu0 0.0
        %2001 = vmatpush1.msra.mxu0 0.0
        %2002 = vmatprep.subr.mxu0 0.0
        %2003 = vmatpush1.msra.mxu0 0.0
        %2004 = vmatprep.subr.mxu0 0.0
        %2005 = vmatpush1.msra.mxu0 0.0
        %2006 = vmatprep.subr.mxu0 0.0
        %2007 = vmatpush1.msra.mxu0 0.0
        %2008 = vmatprep.subr.mxu0 0.0
        %2009 = vmatpush1.msra.mxu0 0.0
        %2010 = vmatprep.subr.mxu0 0.0
        %2011 = vmatpush1.msra.mxu0 0.0
        %2012 = vmatprep.subr.mxu0 0.0
        %2013 = vmatpush1.msra.mxu0 0.0
        %2014 = vmatprep.subr.mxu0 0.0
        %2015 = vmatpush1.msra.mxu0 0.0
        %2016 = vmatprep.subr.mxu0 0.0
        %2017 = vmatpush1.msra.mxu0 0.0
        %2018 = vmatprep.subr.mxu0 0.0
        %2019 = vmatpush1.msra.mxu0 0.0
        %2020 = vmatprep.subr.mxu0 0.0
        %2021 = vmatpush1.msra.mxu0 0.0
        %2022 = vmatprep.subr.mxu0 0.0
        %2023 = vmatpush1.msra.mxu0 0.0
        %2024 = vmatprep.subr.mxu0 0.0
        %2025 = vmatpush1.msra.mxu0 0.0
        %2026 = vmatprep.subr.mxu0 0.0
        %2027 = vmatpush1.msra.mxu0 0.0
        %2028 = vmatprep.subr.mxu0 0.0
        %2029 = vmatpush1.msra.mxu0 0.0
        %2030 = vmatprep.subr.mxu0 0.0
        %2031 = vmatpush1.msra.mxu0 0.0
        %2032 = vmatprep.subr.mxu0 0.0
        %2033 = vmatpush1.msra.mxu0 0.0
        %2034 = vmatprep.subr.mxu0 0.0
        %2035 = vmatpush1.msra.mxu0 0.0
        %2036 = vmatprep.subr.mxu0 0.0
        %2037 = vmatpush1.msra.mxu0 0.0
        %2038 = vmatprep.subr.mxu0 0.0
        %2039 = vmatpush1.msra.mxu0 0.0
        %2040 = vmatprep.mubr.f32.mxu0 0.0
        %v2041 = vand.u32 %v1296, 4294901760
        %2042 = vmatmul.mubr.f32.gmra.mrb[0].mxu0 %v2041
        %v2043 = vpop.f32.mrb[0].mxu0
        %v2044 = vadd.f32 %v1879, %v2043
        %v2045 = vpop.f32.mrb[0].mxu0
        %2046 = vmatprep.mubr.f32.mxu0 0.0
        %v2047 = vand.u32 %v1298, 4294901760
        %2048 = vmatmul.mubr.f32.gmra.mrb[0].mxu0 %v2047
        %v2049 = vpop.f32.mrb[0].mxu0
        %v2050 = vadd.f32 %v1887, %v2049
        %v2051 = vpop.f32.mrb[0].mxu0
        %2052 = vmatprep.mubr.f32.mxu0 0.0
        %v2053 = vand.u32 %v1300, 4294901760
        %2054 = vmatmul.mubr.f32.gmra.mrb[0].mxu0 %v2053
        %v2055 = vpop.f32.mrb[0].mxu0
        %v2056 = vadd.f32 %v1895, %v2055
        %v2057 = vpop.f32.mrb[0].mxu0
        %2058 = vmatprep.mubr.f32.mxu0 0.0
        %v2059 = vand.u32 %v1302, 4294901760
        %2060 = vmatmul.mubr.f32.gmra.mrb[0].mxu0 %v2059
        %v2061 = vpop.f32.mrb[0].mxu0
        %v2062 = vadd.f32 %v1903, %v2061
        %v2063 = vpop.f32.mrb[0].mxu0
        %2064 = vmatprep.mubr.f32.mxu0 0.0
        %v2065 = vand.u32 %v1304, 4294901760
        %2066 = vmatmul.mubr.f32.gmra.mrb[0].mxu0 %v2065
        %v2067 = vpop.f32.mrb[0].mxu0
        %v2068 = vadd.f32 %v1911, %v2067
        %v2069 = vpop.f32.mrb[0].mxu0
        %2070 = vmatprep.mubr.f32.mxu0 0.0
        %v2071 = vand.u32 %v1306, 4294901760
        %2072 = vmatmul.mubr.f32.gmra.mrb[0].mxu0 %v2071
        %v2073 = vpop.f32.mrb[0].mxu0
        %v2074 = vadd.f32 %v1919, %v2073
        %v2075 = vpop.f32.mrb[0].mxu0
        %2076 = vmatprep.mubr.f32.mxu0 0.0
        %v2077 = vand.u32 %v1308, 4294901760
        %2078 = vmatmul.mubr.f32.gmra.mrb[0].mxu0 %v2077
        %v2079 = vpop.f32.mrb[0].mxu0
        %v2080 = vadd.f32 %v1927, %v2079
        %v2081 = vpop.f32.mrb[0].mxu0
        %2082 = vmatprep.mubr.f32.mxu0 0.0
        %v2083 = vand.u32 %v1310, 4294901760
        %2084 = vmatmul.mubr.f32.gmra.mrb[0].mxu0 %v2083
        %v2085 = vpop.f32.mrb[0].mxu0
        %v2086 = vadd.f32 %v1935, %v2085
        %v2087 = vpop.f32.mrb[0].mxu0
        %2088 = vmatprep.mubr.f32.mxu0 0.0
        %v2089 = vand.u32 %v1312, 4294901760
        %2090 = vmatmul.mubr.f32.gmra.mrb[0].mxu0 %v2089
        %v2091 = vpop.f32.mrb[0].mxu0
        %v2092 = vadd.f32 %v1943, %v2091
        %v2093 = vpop.f32.mrb[0].mxu0
        %2094 = vmatprep.mubr.f32.mxu0 0.0
        %v2095 = vand.u32 %v1314, 4294901760
        %2096 = vmatmul.mubr.f32.gmra.mrb[0].mxu0 %v2095
        %v2097 = vpop.f32.mrb[0].mxu0
        %v2098 = vadd.f32 %v1951, %v2097
        %v2099 = vpop.f32.mrb[0].mxu0
        %2100 = vmatprep.mubr.f32.mxu0 0.0
        %v2101 = vand.u32 %v1316, 4294901760
        %2102 = vmatmul.mubr.f32.gmra.mrb[0].mxu0 %v2101
        %v2103 = vpop.f32.mrb[0].mxu0
        %v2104 = vadd.f32 %v1959, %v2103
        %v2105 = vpop.f32.mrb[0].mxu0
        %2106 = vmatprep.mubr.f32.mxu0 0.0
        %v2107 = vand.u32 %v1318, 4294901760
        %2108 = vmatmul.mubr.f32.gmra.mrb[0].mxu0 %v2107
        %v2109 = vpop.f32.mrb[0].mxu0
        %v2110 = vadd.f32 %v1967, %v2109
        %v2111 = vpop.f32.mrb[0].mxu0
        %2112 = vdwg.mxu0
        %2113 = vmatprep.subr.mxu0 0.0
        %v2114 = vand.u32 %v1270, 4294901760
        %2115 = vmatpush1.msra.mxu0 %v2114
        %2116 = vmatprep.subr.mxu0 0.0
        %v2117 = vand.u32 %v1271, 4294901760
        %2118 = vmatpush1.msra.mxu0 %v2117
        %2119 = vmatprep.subr.mxu0 0.0
        %2120 = vmatpush1.msra.mxu0 0.0
        %2121 = vmatprep.subr.mxu0 0.0
        %2122 = vmatpush1.msra.mxu0 0.0
        %2123 = vmatprep.subr.mxu0 0.0
        %2124 = vmatpush1.msra.mxu0 0.0
        %2125 = vmatprep.subr.mxu0 0.0
        %2126 = vmatpush1.msra.mxu0 0.0
        %2127 = vmatprep.subr.mxu0 0.0
        %2128 = vmatpush1.msra.mxu0 0.0
        %2129 = vmatprep.subr.mxu0 0.0
        %2130 = vmatpush1.msra.mxu0 0.0
        %2131 = vmatprep.subr.mxu0 0.0
        %2132 = vmatpush1.msra.mxu0 0.0
        %2133 = vmatprep.subr.mxu0 0.0
        %2134 = vmatpush1.msra.mxu0 0.0
        %2135 = vmatprep.subr.mxu0 0.0
        %2136 = vmatpush1.msra.mxu0 0.0
        %2137 = vmatprep.subr.mxu0 0.0
        %2138 = vmatpush1.msra.mxu0 0.0
        %2139 = vmatprep.subr.mxu0 0.0
        %2140 = vmatpush1.msra.mxu0 0.0
        %2141 = vmatprep.subr.mxu0 0.0
        %2142 = vmatpush1.msra.mxu0 0.0
        %2143 = vmatprep.subr.mxu0 0.0
        %2144 = vmatpush1.msra.mxu0 0.0
        %2145 = vmatprep.subr.mxu0 0.0
        %2146 = vmatpush1.msra.mxu0 0.0
        %2147 = vmatprep.subr.mxu0 0.0
        %2148 = vmatpush1.msra.mxu0 0.0
        %2149 = vmatprep.subr.mxu0 0.0
        %2150 = vmatpush1.msra.mxu0 0.0
        %2151 = vmatprep.subr.mxu0 0.0
        %2152 = vmatpush1.msra.mxu0 0.0
        %2153 = vmatprep.subr.mxu0 0.0
        %2154 = vmatpush1.msra.mxu0 0.0
        %2155 = vmatprep.subr.mxu0 0.0
        %2156 = vmatpush1.msra.mxu0 0.0
        %2157 = vmatprep.subr.mxu0 0.0
        %2158 = vmatpush1.msra.mxu0 0.0
        %2159 = vmatprep.subr.mxu0 0.0
        %2160 = vmatpush1.msra.mxu0 0.0
        %2161 = vmatprep.subr.mxu0 0.0
        %2162 = vmatpush1.msra.mxu0 0.0
        %2163 = vmatprep.subr.mxu0 0.0
        %2164 = vmatpush1.msra.mxu0 0.0
        %2165 = vmatprep.subr.mxu0 0.0
        %2166 = vmatpush1.msra.mxu0 0.0
        %2167 = vmatprep.subr.mxu0 0.0
        %2168 = vmatpush1.msra.mxu0 0.0
        %2169 = vmatprep.subr.mxu0 0.0
        %2170 = vmatpush1.msra.mxu0 0.0
        %2171 = vmatprep.subr.mxu0 0.0
        %2172 = vmatpush1.msra.mxu0 0.0
        %2173 = vmatprep.subr.mxu0 0.0
        %2174 = vmatpush1.msra.mxu0 0.0
        %2175 = vmatprep.subr.mxu0 0.0
        %2176 = vmatpush1.msra.mxu0 0.0
        %2177 = vmatprep.subr.mxu0 0.0
        %2178 = vmatpush1.msra.mxu0 0.0
        %2179 = vmatprep.mubr.f32.mxu0 0.0
        %v2180 = vand.u32 %v1296, 4294901760
        %2181 = vmatmul.mubr.f32.gmra.mrb[0].mxu0 %v2180
        %v2182 = vpop.f32.mrb[0].mxu0
        %v2183 = vadd.f32 %v2044, %v2182
        %v2184 = vpop.f32.mrb[0].mxu0
        %2185 = vmatprep.mubr.f32.mxu0 0.0
        %v2186 = vand.u32 %v1298, 4294901760
        %2187 = vmatmul.mubr.f32.gmra.mrb[0].mxu0 %v2186
        %v2188 = vpop.f32.mrb[0].mxu0
        %v2189 = vadd.f32 %v2050, %v2188
        %v2190 = vpop.f32.mrb[0].mxu0
        %2191 = vmatprep.mubr.f32.mxu0 0.0
        %v2192 = vand.u32 %v1300, 4294901760
        %2193 = vmatmul.mubr.f32.gmra.mrb[0].mxu0 %v2192
        %v2194 = vpop.f32.mrb[0].mxu0
        %v2195 = vadd.f32 %v2056, %v2194
        %v2196 = vpop.f32.mrb[0].mxu0
        %2197 = vmatprep.mubr.f32.mxu0 0.0
        %v2198 = vand.u32 %v1302, 4294901760
        %2199 = vmatmul.mubr.f32.gmra.mrb[0].mxu0 %v2198
        %v2200 = vpop.f32.mrb[0].mxu0
        %v2201 = vadd.f32 %v2062, %v2200
        %v2202 = vpop.f32.mrb[0].mxu0
        %2203 = vmatprep.mubr.f32.mxu0 0.0
        %v2204 = vand.u32 %v1304, 4294901760
        %2205 = vmatmul.mubr.f32.gmra.mrb[0].mxu0 %v2204
        %v2206 = vpop.f32.mrb[0].mxu0
        %v2207 = vadd.f32 %v2068, %v2206
        %v2208 = vpop.f32.mrb[0].mxu0
        %2209 = vmatprep.mubr.f32.mxu0 0.0
        %v2210 = vand.u32 %v1306, 4294901760
        %2211 = vmatmul.mubr.f32.gmra.mrb[0].mxu0 %v2210
        %v2212 = vpop.f32.mrb[0].mxu0
        %v2213 = vadd.f32 %v2074, %v2212
        %v2214 = vpop.f32.mrb[0].mxu0
        %2215 = vmatprep.mubr.f32.mxu0 0.0
        %v2216 = vand.u32 %v1308, 4294901760
        %2217 = vmatmul.mubr.f32.gmra.mrb[0].mxu0 %v2216
        %v2218 = vpop.f32.mrb[0].mxu0
        %v2219 = vadd.f32 %v2080, %v2218
        %v2220 = vpop.f32.mrb[0].mxu0
        %2221 = vmatprep.mubr.f32.mxu0 0.0
        %v2222 = vand.u32 %v1310, 4294901760
        %2223 = vmatmul.mubr.f32.gmra.mrb[0].mxu0 %v2222
        %v2224 = vpop.f32.mrb[0].mxu0
        %v2225 = vadd.f32 %v2086, %v2224
        %v2226 = vpop.f32.mrb[0].mxu0
        %2227 = vmatprep.mubr.f32.mxu0 0.0
        %v2228 = vand.u32 %v1312, 4294901760
        %2229 = vmatmul.mubr.f32.gmra.mrb[0].mxu0 %v2228
        %v2230 = vpop.f32.mrb[0].mxu0
        %v2231 = vadd.f32 %v2092, %v2230
        %v2232 = vpop.f32.mrb[0].mxu0
        %2233 = vmatprep.mubr.f32.mxu0 0.0
        %v2234 = vand.u32 %v1314, 4294901760
        %2235 = vmatmul.mubr.f32.gmra.mrb[0].mxu0 %v2234
        %v2236 = vpop.f32.mrb[0].mxu0
        %v2237 = vadd.f32 %v2098, %v2236
        %v2238 = vpop.f32.mrb[0].mxu0
        %2239 = vmatprep.mubr.f32.mxu0 0.0
        %v2240 = vand.u32 %v1316, 4294901760
        %2241 = vmatmul.mubr.f32.gmra.mrb[0].mxu0 %v2240
        %v2242 = vpop.f32.mrb[0].mxu0
        %v2243 = vadd.f32 %v2104, %v2242
        %v2244 = vpop.f32.mrb[0].mxu0
        %2245 = vmatprep.mubr.f32.mxu0 0.0
        %v2246 = vand.u32 %v1318, 4294901760
        %2247 = vmatmul.mubr.f32.gmra.mrb[0].mxu0 %v2246
        %v2248 = vpop.f32.mrb[0].mxu0
        %v2249 = vadd.f32 %v2110, %v2248
        %v2250 = vpop.f32.mrb[0].mxu0
        %2251 = vdwg.mxu0
        %s2252 = scalar_lea.vmem %s208, 192 [#allocation7]
        %2253 = vst.msk [vmem:[%s2252] sm:$0xff] %vm1196, %v2183
        %2254 = vst.msk [vmem:[%s2252 + $0x8] sm:$0xff] %vm1196, %v2189
        %2255 = vst.msk [vmem:[%s2252 + $0x10] sm:$0xff] %vm1196, %v2195
        %2256 = vst.msk [vmem:[%s2252 + $0x18] sm:$0xff] %vm1196, %v2201
        %2257 = vst.msk [vmem:[%s2252 + $0x20] sm:$0xff] %vm1196, %v2207
        %2258 = vst.msk [vmem:[%s2252 + $0x28] sm:$0xff] %vm1196, %v2213
        %2259 = vst.msk [vmem:[%s2252 + $0x30] sm:$0xff] %vm1196, %v2219
        %2260 = vst.msk [vmem:[%s2252 + $0x38] sm:$0xff] %vm1196, %v2225
        %2261 = vst.msk [vmem:[%s2252 + $0x40] sm:$0xff] %vm1196, %v2231
        %2262 = vst.msk [vmem:[%s2252 + $0x48] sm:$0xff] %vm1196, %v2237
        %2263 = vst.msk [vmem:[%s2252 + $0x50] sm:$0xff] %vm1196, %v2243
        %2264 = vst.msk [vmem:[%s2252 + $0x58] sm:$0xff] %vm1196, %v2249
        %2277 = vrot.lane.b32.xlu0 %v2183, 120
        %v2278 = vpop.permute.xlu0 %2277
        %2279 = vrot.lane.b32.xlu0 %v2189, 120
        %v2280 = vpop.permute.xlu0 %2279
        %2281 = vrot.lane.b32.xlu0 %v2195, 120
        %v2282 = vpop.permute.xlu0 %2281
        %2283 = vrot.lane.b32.xlu0 %v2201, 120
        %v2284 = vpop.permute.xlu0 %2283
        %2285 = vrot.lane.b32.xlu0 %v2207, 120
        %v2286 = vpop.permute.xlu0 %2285
        %2287 = vrot.lane.b32.xlu0 %v2213, 120
        %v2288 = vpop.permute.xlu0 %2287
        %2289 = vrot.lane.b32.xlu0 %v2219, 120
        %v2290 = vpop.permute.xlu0 %2289
        %2291 = vrot.lane.b32.xlu0 %v2225, 120
        %v2292 = vpop.permute.xlu0 %2291
        %2293 = vrot.lane.b32.xlu0 %v2231, 120
        %v2294 = vpop.permute.xlu0 %2293
        %2295 = vrot.lane.b32.xlu0 %v2237, 120
        %v2296 = vpop.permute.xlu0 %2295
        %2297 = vrot.lane.b32.xlu0 %v2243, 120
        %v2298 = vpop.permute.xlu0 %2297
        %2299 = vrot.lane.b32.xlu0 %v2249, 120
        %v2300 = vpop.permute.xlu0 %2299
        %s2313 = scalar_lea.vmem %s208, 288 [#allocation7]
        %2314 = vst.msk [vmem:[%s2313] sm:$0xff] %vm1196, %v2278
        %2315 = vst.msk [vmem:[%s2313 + $0x8] sm:$0xff] %vm1196, %v2280
        %2316 = vst.msk [vmem:[%s2313 + $0x10] sm:$0xff] %vm1196, %v2282
        %2317 = vst.msk [vmem:[%s2313 + $0x18] sm:$0xff] %vm1196, %v2284
        %2318 = vst.msk [vmem:[%s2313 + $0x20] sm:$0xff] %vm1196, %v2286
        %2319 = vst.msk [vmem:[%s2313 + $0x28] sm:$0xff] %vm1196, %v2288
        %2320 = vst.msk [vmem:[%s2313 + $0x30] sm:$0xff] %vm1196, %v2290
        %2321 = vst.msk [vmem:[%s2313 + $0x38] sm:$0xff] %vm1196, %v2292
        %2322 = vst.msk [vmem:[%s2313 + $0x40] sm:$0xff] %vm1196, %v2294
        %2323 = vst.msk [vmem:[%s2313 + $0x48] sm:$0xff] %vm1196, %v2296
        %2324 = vst.msk [vmem:[%s2313 + $0x50] sm:$0xff] %vm1196, %v2298
        %2325 = vst.msk [vmem:[%s2313 + $0x58] sm:$0xff] %vm1196, %v2300
        %s2326 = sand.u32 %s102, 1
        %s2327 = scalar_lea.sflag [#allocation4], %s2326
        %s2328 = sand.u32 %s102, 1
        %s2329 = smul.addr %s2328, 384
        %s2330 = scalar_lea.vmem [#allocation7], %s2329
        // Predicated region
        $region37: #{tpu_custom_call.1} parent=27 // pred_check
          %p2331 = pneg %p112
        $region38: #{tpu_custom_call.1} parent=27 // pred_check_branch
          %2333 = sbr.rel (%p2331) target = $region40
        $region39: #{tpu_custom_call.1} parent=27 // pred_region
          %s2334 = smul.u32 4, %s26
          %s2335 = smul.u32 3, %s27
          %s2337 = ssub.s32 6144, 6144
          %2338 = vsyncadd %s2327, %s2337
          %s2339 = smul.addr %s2334, 3
          %s2340 = sadd.s32 %s2335, %s2339
          %s2341 = smul.addr %s25, 48
          %s2342 = sadd.s32 %s2340, %s2341
          %s2343 = smul.addr %s2342, 128
          %s2344 = scalar_lea.hbm %s2, %s2343
          %s2345 = sshll.u32 %s2330, 4
          %s2346 = int_to_ptr.vmem [resolvable:$true] %s2345
          %2351 = dma.vmem_to_hbm [thread:$0]  %s2346, 6144, %s2344, %s2327, 128, 128, 8
        $region40: #{tpu_custom_call.1} parent=27 // pred_fallthru
          _
      $region28: #{tpu_custom_call.1} parent=5 // pred_fallthru
        _
      %p2352 = scmp.le.s32.totalorder 2, %s15
      // Predicated region
      $region41: #{tpu_custom_call.1} parent=5 // pred_check
        %p2353 = pneg %p2352
      $region42: #{tpu_custom_call.1} parent=5 // pred_check_branch
        %2355 = sbr.rel (%p2353) target = $region44
      $region43: #{tpu_custom_call.1} parent=5 // pred_region
        %s2356 = ssub.s32 %s15, 2
        // Predicated region
        $region45: #{tpu_custom_call.1} parent=43 // pred_check
          %p2357 = pneg %p118
        $region46: #{tpu_custom_call.1} parent=43 // pred_check_branch
          %2359 = sbr.rel (%p2357) target = $region48
        $region47: #{tpu_custom_call.1} parent=43 // pred_region
          %s2360 = sand.u32 %s103, 1
          %s2361 = scalar_lea.sflag [#allocation4], %s2360
          %s2362 = sand.u32 %s103, 1
          %s2363 = smul.addr %s2362, 384
          %s2364 = scalar_lea.vmem [#allocation7], %s2363
          %2365 = dma.done %s2361, 6144
        $region48: #{tpu_custom_call.1} parent=43 // pred_fallthru
          _
      $region44: #{tpu_custom_call.1} parent=5 // pred_fallthru
        _
    $region6: #{tpu_custom_call.1} parent=1 // loop_footer
      %s19 = sadd.s32 1, %s15
    $region7: #{tpu_custom_call.1} parent=1 // loop_footer_branch
      %14 = sbr.rel target = $region3
    $region8: #{tpu_custom_call.1} parent=1 // loop_exit
      _
    %2366 = vsyncpa [#allocation3], 1
    %s2367 = scalar_lea.sflag [#allocation3], 1
    %2368 = vsyncpa %s2367, 1
    %2369 = vsyncpa [#allocation6], 1
    %2370 = vsyncpa [#allocation4], 1
    %s2371 = scalar_lea.sflag [#allocation4], 1
    %2372 = vsyncpa %s2371, 1

</llo_original>
